<compile_context>
chip_gen: v7x
topology: tpu7x:2x2x1
jax: 0.10.0
libtpu: 0.0.40
codegen_flags: <defaults>
</compile_context>

<pallas_src>
import functools

import jax
import jax.numpy as jnp
from jax.experimental import pallas as pl
from jax.experimental.pallas import tpu as pltpu


_TARGET_BATCH_TILE = 256  # 256-row M tile (review: 256 for v6e/v7x, fine on v5e)


def _sigmoid(x):
    # Numerically-stable sigmoid on the EUP tanh unit (no VALU f32 divide).
    return 0.5 * (jnp.tanh(0.5 * x) + 1.0)


def _round_up(v, m):
    return ((v + m - 1) // m) * m


def gru_cell_kernel(x_ref, h_ref, wx_ref, bx_ref, whzr_ref, whh_ref, bhh_ref,
                    out_ref, *, hidden_pad):
    H = hidden_pad
    x_bf = x_ref[...]                       # (bt, Dp)  bf16 -- matmul only
    h = h_ref[...]                          # (bt, Hp)  f32  -- gating math
    h_bf = h.astype(jnp.bfloat16)           # bf16 copy for the MXU

    # Fused x-side GEMM: (bt, Dp) @ (Dp, 3Hp); bias = [bxz+bhz | bxr+bhr | bxh].
    xp = jnp.dot(x_bf, wx_ref[...],
                 preferred_element_type=jnp.float32) + bx_ref[...]
    # Fused h-side GEMM for the z and r gates: (bt, Hp) @ (Hp, 2Hp).
    hp = jnp.dot(h_bf, whzr_ref[...], preferred_element_type=jnp.float32)

    # All slices below are 128-lane aligned because Hp % 128 == 0.
    z = _sigmoid(xp[:, :H] + hp[:, :H])
    r = _sigmoid(xp[:, H:2 * H] + hp[:, H:])

    rh_bf = (r * h).astype(jnp.bfloat16)     # reset applied BEFORE Whh (spec)
    h_tilde = jnp.tanh(
        xp[:, 2 * H:]
        + jnp.dot(rh_bf, whh_ref[...], preferred_element_type=jnp.float32)
        + bhh_ref[...]
    )

    out_ref[...] = (h + z * (h_tilde - h)).astype(out_ref.dtype)


def _weight_spec(block_shape, single_buffer):
    const = lambda i: (0, 0)
    if single_buffer:
        # Constant index_map => nothing to pipeline; single-buffer the block.
        return pl.BlockSpec(block_shape, const, pipeline_mode=pl.Buffered(1))
    return pl.BlockSpec(block_shape, const)


def gru_cell_forward(x, h, params, *, single_buffer_weights=True):
    """x: (B, input_size), h: (B, hidden_size) -> h_new: (B, hidden_size)."""
    B, D_in = x.shape
    H = h.shape[-1]

    # Lane-align the feature dims (free vreg selects + lane-dense stores).
    Dp = _round_up(D_in, 128)
    Hp = _round_up(H, 128)

    def pad2(w, rows, cols):
        return jnp.pad(w, ((0, rows - w.shape[0]), (0, cols - w.shape[1])))

    # Fold + pad weights/biases once outside the kernel (tiny one-time cost).
    wx = jnp.concatenate(
        [pad2(params["wxz"], Dp, Hp),
         pad2(params["wxr"], Dp, Hp),
         pad2(params["wxh"], Dp, Hp)], axis=1).astype(jnp.bfloat16)   # (Dp, 3Hp)
    bx = jnp.concatenate(
        [pad2(params["bxz"] + params["bhz"], 1, Hp),
         pad2(params["bxr"] + params["bhr"], 1, Hp),
         pad2(params["bxh"], 1, Hp)], axis=1)                          # (1, 3Hp) f32
    whzr = jnp.concatenate(
        [pad2(params["whz"], Hp, Hp),
         pad2(params["whr"], Hp, Hp)], axis=1).astype(jnp.bfloat16)    # (Hp, 2Hp)
    whh = pad2(params["whh"], Hp, Hp).astype(jnp.bfloat16)             # (Hp, Hp)
    bhh = pad2(params["bhh"], 1, Hp)                                   # (1, Hp) f32

    # Fixed batch tile (multiple of 16 for the bf16 x tile), padded cdiv grid.
    bt = min(_TARGET_BATCH_TILE, _round_up(B, 16))
    Bp = _round_up(B, bt)
    x_p = jnp.pad(x, ((0, Bp - B), (0, Dp - D_in))).astype(jnp.bfloat16)
    h_p = jnp.pad(h, ((0, Bp - B), (0, Hp - H)))                       # keep f32
    grid = (Bp // bt,)

    # Explicit scoped-VMEM budget derived from the actual buffers (+headroom).
    wbuf = 1 if single_buffer_weights else 2
    weight_bytes = 2 * (Dp * 3 * Hp + Hp * 2 * Hp + Hp * Hp)           # bf16
    bias_bytes = 4 * (3 * Hp + Hp)                                      # f32
    io_bytes = 2 * (bt * Dp * 2 + bt * Hp * 4 + bt * Hp * 4)            # dbl-buf x/h/out
    est = wbuf * (weight_bytes + bias_bytes) + io_bytes
    vmem_limit = int(min(48 * 2**20, max(16 * 2**20, 2 * est + (2 << 20))))

    out_padded = pl.pallas_call(
        functools.partial(gru_cell_kernel, hidden_pad=Hp),
        out_shape=jax.ShapeDtypeStruct((Bp, Hp), h.dtype),
        grid_spec=pltpu.PrefetchScalarGridSpec(
            num_scalar_prefetch=0,
            grid=grid,
            in_specs=[
                pl.BlockSpec((bt, Dp), lambda i: (i, 0)),          # x  (batch-tiled, bf16)
                pl.BlockSpec((bt, Hp), lambda i: (i, 0)),          # h  (batch-tiled, f32)
                _weight_spec((Dp, 3 * Hp), single_buffer_weights),  # Wx  fused z|r|n
                _weight_spec((1, 3 * Hp), single_buffer_weights),   # bx  folded biases
                _weight_spec((Hp, 2 * Hp), single_buffer_weights),  # Wh  fused z|r
                _weight_spec((Hp, Hp), single_buffer_weights),      # Whh
                _weight_spec((1, Hp), single_buffer_weights),       # bhh
            ],
            out_specs=pl.BlockSpec((bt, Hp), lambda i: (i, 0)),
        ),
        compiler_params=pltpu.CompilerParams(
            dimension_semantics=("parallel",),   # batch tiles are independent
            vmem_limit_bytes=vmem_limit,
        ),
    )(x_p, h_p, wx, bx, whzr, whh, bhh)

    return out_padded[:B, :H]


def gru_cell_reference(x, h, p):
    """Pure-JAX f32 reference mirroring the PyTorch module semantics."""
    z = jax.nn.sigmoid(x @ p["wxz"] + p["bxz"] + h @ p["whz"] + p["bhz"])
    r = jax.nn.sigmoid(x @ p["wxr"] + p["bxr"] + h @ p["whr"] + p["bhr"])
    h_tilde = jnp.tanh(x @ p["wxh"] + p["bxh"] + (r * h) @ p["whh"] + p["bhh"])
    return (1.0 - z) * h + z * h_tilde


def init_params(key, input_size, hidden_size):
    # Weights stored (in_features, out_features) so y = x @ W + b.
    names_shapes = {
        "wxz": (input_size, hidden_size), "bxz": (1, hidden_size),
        "whz": (hidden_size, hidden_size), "bhz": (1, hidden_size),
        "wxr": (input_size, hidden_size), "bxr": (1, hidden_size),
        "whr": (hidden_size, hidden_size), "bhr": (1, hidden_size),
        "wxh": (input_size, hidden_size), "bxh": (1, hidden_size),
        "whh": (hidden_size, hidden_size), "bhh": (1, hidden_size),
    }
    params = {}
    keys = jax.random.split(key, len(names_shapes))
    for k, (name, shape) in zip(keys, names_shapes.items()):
        params[name] = jax.random.normal(k, shape, jnp.float32) * 0.1
    return params


if __name__ == "__main__":
    batch, input_size, hidden_size = 2, 16, 32

    key = jax.random.PRNGKey(0)
    kx, kh, kp = jax.random.split(key, 3)
    x = jax.random.normal(kx, (batch, input_size), jnp.float32)
    h = jax.random.normal(kh, (batch, hidden_size), jnp.float32)
    params = init_params(kp, input_size, hidden_size)

    try:
        out = gru_cell_forward(x, h, params)
    except Exception:
        # Graceful degradation: if this JAX build rejects
        # pipeline_mode=pl.Buffered(1) on grid-pipelined blocks, fall back to
        # default (double) buffering for the weight blocks.
        out = gru_cell_forward(x, h, params, single_buffer_weights=False)
    out = jax.block_until_ready(out)

    ref = gru_cell_reference(x, h, params)
    assert out.shape == (batch, hidden_size)
    # Loose tolerance accounts for bf16 weights / matmul operands.
    assert jnp.allclose(out, ref, atol=3e-2, rtol=3e-2), (
        float(jnp.max(jnp.abs(out - ref))), out, ref)

    print("KERNEL_OK")
</pallas_src>

<mosaic_0001>
module attributes {stable_mosaic.version = 11 : i64} {
  func.func @gru_cell_kernel(%arg0: i32, %arg1: memref<16x128xbf16, #tpu.memory_space<vmem>>, %arg2: memref<16x128xf32, #tpu.memory_space<vmem>>, %arg3: memref<128x384xbf16, #tpu.memory_space<vmem>>, %arg4: memref<1x384xf32, #tpu.memory_space<vmem>>, %arg5: memref<128x256xbf16, #tpu.memory_space<vmem>>, %arg6: memref<128x128xbf16, #tpu.memory_space<vmem>>, %arg7: memref<1x128xf32, #tpu.memory_space<vmem>>, %arg8: memref<16x128xf32, #tpu.memory_space<vmem>>) attributes {dimension_semantics = [#tpu.dimension_semantics<parallel>], iteration_bounds = array<i64: 1>, scalar_prefetch = 0 : i64, scratch_operands = 0 : i64, tpu.core_type = #tpu.core_type<tc>, window_params = [{transform_indices = @transform_0, window_bounds = array<i64: 16, 128>}, {transform_indices = @transform_1, window_bounds = array<i64: 16, 128>}, {pipeline_mode = #tpu.pipeline_mode<synchronous>, transform_indices = @transform_2, window_bounds = array<i64: 128, 384>}, {pipeline_mode = #tpu.pipeline_mode<synchronous>, transform_indices = @transform_3, window_bounds = array<i64: 1, 384>}, {pipeline_mode = #tpu.pipeline_mode<synchronous>, transform_indices = @transform_4, window_bounds = array<i64: 128, 256>}, {pipeline_mode = #tpu.pipeline_mode<synchronous>, transform_indices = @transform_5, window_bounds = array<i64: 128, 128>}, {pipeline_mode = #tpu.pipeline_mode<synchronous>, transform_indices = @transform_6, window_bounds = array<i64: 1, 128>}, {transform_indices = @transform_7, window_bounds = array<i64: 16, 128>}]} {
    %c0 = arith.constant 0 : index
    %c0_0 = arith.constant 0 : index
    %0 = vector.load %arg1[%c0, %c0_0] : memref<16x128xbf16, #tpu.memory_space<vmem>>, vector<16x128xbf16>
    %c0_1 = arith.constant 0 : index
    %c0_2 = arith.constant 0 : index
    %1 = vector.load %arg2[%c0_1, %c0_2] : memref<16x128xf32, #tpu.memory_space<vmem>>, vector<16x128xf32>
    %2 = arith.truncf %1 : vector<16x128xf32> to vector<16x128xbf16>
    %c0_3 = arith.constant 0 : index
    %c0_4 = arith.constant 0 : index
    %3 = vector.load %arg3[%c0_3, %c0_4] : memref<128x384xbf16, #tpu.memory_space<vmem>>, vector<128x384xbf16>
    %cst = arith.constant dense<0.000000e+00> : vector<16x384xf32>
    %4 = tpu.matmul %0, %3, %cst {dimension_numbers = #tpu.dot_dimension_numbers<[1], [0], [0], [1], [0, 0, 1, 1], [], []>} : vector<16x128xbf16>, vector<128x384xbf16>, vector<16x384xf32> -> vector<16x384xf32>
    %c0_5 = arith.constant 0 : index
    %c0_6 = arith.constant 0 : index
    %5 = vector.load %arg4[%c0_5, %c0_6] : memref<1x384xf32, #tpu.memory_space<vmem>>, vector<1x384xf32>
    %6 = vector.broadcast %5 : vector<1x384xf32> to vector<16x384xf32>
    %7 = arith.addf %4, %6 : vector<16x384xf32>
    %c0_7 = arith.constant 0 : index
    %c0_8 = arith.constant 0 : index
    %8 = vector.load %arg5[%c0_7, %c0_8] : memref<128x256xbf16, #tpu.memory_space<vmem>>, vector<128x256xbf16>
    %cst_9 = arith.constant dense<0.000000e+00> : vector<16x256xf32>
    %9 = tpu.matmul %2, %8, %cst_9 {dimension_numbers = #tpu.dot_dimension_numbers<[1], [0], [0], [1], [0, 0, 1, 1], [], []>} : vector<16x128xbf16>, vector<128x256xbf16>, vector<16x256xf32> -> vector<16x256xf32>
    %10 = vector.extract_strided_slice %7 {offsets = [0, 0], sizes = [16, 128], strides = [1, 1]} : vector<16x384xf32> to vector<16x128xf32>
    %11 = vector.extract_strided_slice %9 {offsets = [0, 0], sizes = [16, 128], strides = [1, 1]} : vector<16x256xf32> to vector<16x128xf32>
    %12 = arith.addf %10, %11 : vector<16x128xf32>
    %cst_10 = arith.constant 5.000000e-01 : f32
    %13 = vector.broadcast %cst_10 : f32 to vector<16x128xf32>
    %14 = arith.mulf %13, %12 : vector<16x128xf32>
    %15 = math.tanh %14 : vector<16x128xf32>
    %cst_11 = arith.constant 1.000000e+00 : f32
    %16 = vector.broadcast %cst_11 : f32 to vector<16x128xf32>
    %17 = arith.addf %15, %16 : vector<16x128xf32>
    %cst_12 = arith.constant 5.000000e-01 : f32
    %18 = vector.broadcast %cst_12 : f32 to vector<16x128xf32>
    %19 = arith.mulf %18, %17 : vector<16x128xf32>
    %20 = vector.extract_strided_slice %7 {offsets = [0, 128], sizes = [16, 128], strides = [1, 1]} : vector<16x384xf32> to vector<16x128xf32>
    %21 = vector.extract_strided_slice %9 {offsets = [0, 128], sizes = [16, 128], strides = [1, 1]} : vector<16x256xf32> to vector<16x128xf32>
    %22 = arith.addf %20, %21 : vector<16x128xf32>
    %cst_13 = arith.constant 5.000000e-01 : f32
    %23 = vector.broadcast %cst_13 : f32 to vector<16x128xf32>
    %24 = arith.mulf %23, %22 : vector<16x128xf32>
    %25 = math.tanh %24 : vector<16x128xf32>
    %cst_14 = arith.constant 1.000000e+00 : f32
    %26 = vector.broadcast %cst_14 : f32 to vector<16x128xf32>
    %27 = arith.addf %25, %26 : vector<16x128xf32>
    %cst_15 = arith.constant 5.000000e-01 : f32
    %28 = vector.broadcast %cst_15 : f32 to vector<16x128xf32>
    %29 = arith.mulf %28, %27 : vector<16x128xf32>
    %30 = arith.mulf %29, %1 : vector<16x128xf32>
    %31 = arith.truncf %30 : vector<16x128xf32> to vector<16x128xbf16>
    %32 = vector.extract_strided_slice %7 {offsets = [0, 256], sizes = [16, 128], strides = [1, 1]} : vector<16x384xf32> to vector<16x128xf32>
    %c0_16 = arith.constant 0 : index
    %c0_17 = arith.constant 0 : index
    %33 = vector.load %arg6[%c0_16, %c0_17] : memref<128x128xbf16, #tpu.memory_space<vmem>>, vector<128x128xbf16>
    %cst_18 = arith.constant dense<0.000000e+00> : vector<16x128xf32>
    %34 = tpu.matmul %31, %33, %cst_18 {dimension_numbers = #tpu.dot_dimension_numbers<[1], [0], [0], [1], [0, 0, 1, 1], [], []>} : vector<16x128xbf16>, vector<128x128xbf16>, vector<16x128xf32> -> vector<16x128xf32>
    %35 = arith.addf %32, %34 : vector<16x128xf32>
    %c0_19 = arith.constant 0 : index
    %c0_20 = arith.constant 0 : index
    %36 = vector.load %arg7[%c0_19, %c0_20] : memref<1x128xf32, #tpu.memory_space<vmem>>, vector<1x128xf32>
    %37 = vector.broadcast %36 : vector<1x128xf32> to vector<16x128xf32>
    %38 = arith.addf %35, %37 : vector<16x128xf32>
    %39 = math.tanh %38 : vector<16x128xf32>
    %40 = arith.subf %39, %1 : vector<16x128xf32>
    %41 = arith.mulf %19, %40 : vector<16x128xf32>
    %42 = arith.addf %1, %41 : vector<16x128xf32>
    %c0_21 = arith.constant 0 : index
    %c0_22 = arith.constant 0 : index
    %43 = vector.load %arg8[%c0_21, %c0_22] : memref<16x128xf32, #tpu.memory_space<vmem>>, vector<16x128xf32>
    tpu.vector_store %arg8[%c0_21, %c0_22], %42 {strides = array<i32>} : memref<16x128xf32, #tpu.memory_space<vmem>>, vector<16x128xf32>,
    return
  }
  func.func @transform_0(%arg0: i32) -> (i32, i32) {
    %c0_i32 = arith.constant 0 : i32
    %c0_i32_0 = arith.constant 0 : i32
    return %arg0, %c0_i32 : i32, i32
  }
  func.func @transform_1(%arg0: i32) -> (i32, i32) {
    %c0_i32 = arith.constant 0 : i32
    %c0_i32_0 = arith.constant 0 : i32
    return %arg0, %c0_i32 : i32, i32
  }
  func.func @transform_2(%arg0: i32) -> (i32, i32) {
    %c0_i32 = arith.constant 0 : i32
    %c0_i32_0 = arith.constant 0 : i32
    %c0_i32_1 = arith.constant 0 : i32
    return %c0_i32, %c0_i32_0 : i32, i32
  }
  func.func @transform_3(%arg0: i32) -> (i32, i32) {
    %c0_i32 = arith.constant 0 : i32
    %c0_i32_0 = arith.constant 0 : i32
    %c0_i32_1 = arith.constant 0 : i32
    return %c0_i32, %c0_i32_0 : i32, i32
  }
  func.func @transform_4(%arg0: i32) -> (i32, i32) {
    %c0_i32 = arith.constant 0 : i32
    %c0_i32_0 = arith.constant 0 : i32
    %c0_i32_1 = arith.constant 0 : i32
    return %c0_i32, %c0_i32_0 : i32, i32
  }
  func.func @transform_5(%arg0: i32) -> (i32, i32) {
    %c0_i32 = arith.constant 0 : i32
    %c0_i32_0 = arith.constant 0 : i32
    %c0_i32_1 = arith.constant 0 : i32
    return %c0_i32, %c0_i32_0 : i32, i32
  }
  func.func @transform_6(%arg0: i32) -> (i32, i32) {
    %c0_i32 = arith.constant 0 : i32
    %c0_i32_0 = arith.constant 0 : i32
    %c0_i32_1 = arith.constant 0 : i32
    return %c0_i32, %c0_i32_0 : i32, i32
  }
  func.func @transform_7(%arg0: i32) -> (i32, i32) {
    %c0_i32 = arith.constant 0 : i32
    %c0_i32_0 = arith.constant 0 : i32
    return %arg0, %c0_i32 : i32, i32
  }
}

module attributes {stable_mosaic.version = 11 : i64} {
  func.func @gru_cell_kernel(%arg0: i32, %arg1: memref<16x128xbf16, #tpu.memory_space<vmem>>, %arg2: memref<16x128xf32, #tpu.memory_space<vmem>>, %arg3: memref<128x384xbf16, #tpu.memory_space<vmem>>, %arg4: memref<1x384xf32, #tpu.memory_space<vmem>>, %arg5: memref<128x256xbf16, #tpu.memory_space<vmem>>, %arg6: memref<128x128xbf16, #tpu.memory_space<vmem>>, %arg7: memref<1x128xf32, #tpu.memory_space<vmem>>, %arg8: memref<16x128xf32, #tpu.memory_space<vmem>>) attributes {dimension_semantics = [#tpu.dimension_semantics<parallel>], iteration_bounds = array<i64: 1>, scalar_prefetch = 0 : i64, scratch_operands = 0 : i64, tpu.core_type = #tpu.core_type<tc>, window_params = [{transform_indices = @transform_0, window_bounds = array<i64: 16, 128>}, {transform_indices = @transform_1, window_bounds = array<i64: 16, 128>}, {pipeline_mode = #tpu.pipeline_mode<synchronous>, transform_indices = @transform_2, window_bounds = array<i64: 128, 384>}, {pipeline_mode = #tpu.pipeline_mode<synchronous>, transform_indices = @transform_3, window_bounds = array<i64: 1, 384>}, {pipeline_mode = #tpu.pipeline_mode<synchronous>, transform_indices = @transform_4, window_bounds = array<i64: 128, 256>}, {pipeline_mode = #tpu.pipeline_mode<synchronous>, transform_indices = @transform_5, window_bounds = array<i64: 128, 128>}, {pipeline_mode = #tpu.pipeline_mode<synchronous>, transform_indices = @transform_6, window_bounds = array<i64: 1, 128>}, {transform_indices = @transform_7, window_bounds = array<i64: 16, 128>}]} {
    %c0 = arith.constant 0 : index
    %c0_0 = arith.constant 0 : index
    %0 = vector.load %arg1[%c0, %c0_0] : memref<16x128xbf16, #tpu.memory_space<vmem>>, vector<16x128xbf16>
    %c0_1 = arith.constant 0 : index
    %c0_2 = arith.constant 0 : index
    %1 = vector.load %arg2[%c0_1, %c0_2] : memref<16x128xf32, #tpu.memory_space<vmem>>, vector<16x128xf32>
    %2 = arith.truncf %1 : vector<16x128xf32> to vector<16x128xbf16>
    %c0_3 = arith.constant 0 : index
    %c0_4 = arith.constant 0 : index
    %3 = vector.load %arg3[%c0_3, %c0_4] : memref<128x384xbf16, #tpu.memory_space<vmem>>, vector<128x384xbf16>
    %cst = arith.constant dense<0.000000e+00> : vector<16x384xf32>
    %4 = tpu.matmul %0, %3, %cst {dimension_numbers = #tpu.dot_dimension_numbers<[1], [0], [0], [1], [0, 0, 1, 1], [], []>} : vector<16x128xbf16>, vector<128x384xbf16>, vector<16x384xf32> -> vector<16x384xf32>
    %c0_5 = arith.constant 0 : index
    %c0_6 = arith.constant 0 : index
    %5 = vector.load %arg4[%c0_5, %c0_6] : memref<1x384xf32, #tpu.memory_space<vmem>>, vector<1x384xf32>
    %6 = vector.broadcast %5 : vector<1x384xf32> to vector<16x384xf32>
    %7 = arith.addf %4, %6 : vector<16x384xf32>
    %c0_7 = arith.constant 0 : index
    %c0_8 = arith.constant 0 : index
    %8 = vector.load %arg5[%c0_7, %c0_8] : memref<128x256xbf16, #tpu.memory_space<vmem>>, vector<128x256xbf16>
    %cst_9 = arith.constant dense<0.000000e+00> : vector<16x256xf32>
    %9 = tpu.matmul %2, %8, %cst_9 {dimension_numbers = #tpu.dot_dimension_numbers<[1], [0], [0], [1], [0, 0, 1, 1], [], []>} : vector<16x128xbf16>, vector<128x256xbf16>, vector<16x256xf32> -> vector<16x256xf32>
    %10 = vector.extract_strided_slice %7 {offsets = [0, 0], sizes = [16, 128], strides = [1, 1]} : vector<16x384xf32> to vector<16x128xf32>
    %11 = vector.extract_strided_slice %9 {offsets = [0, 0], sizes = [16, 128], strides = [1, 1]} : vector<16x256xf32> to vector<16x128xf32>
    %12 = arith.addf %10, %11 : vector<16x128xf32>
    %cst_10 = arith.constant 5.000000e-01 : f32
    %13 = vector.broadcast %cst_10 : f32 to vector<16x128xf32>
    %14 = arith.mulf %13, %12 : vector<16x128xf32>
    %15 = math.tanh %14 : vector<16x128xf32>
    %cst_11 = arith.constant 1.000000e+00 : f32
    %16 = vector.broadcast %cst_11 : f32 to vector<16x128xf32>
    %17 = arith.addf %15, %16 : vector<16x128xf32>
    %cst_12 = arith.constant 5.000000e-01 : f32
    %18 = vector.broadcast %cst_12 : f32 to vector<16x128xf32>
    %19 = arith.mulf %18, %17 : vector<16x128xf32>
    %20 = vector.extract_strided_slice %7 {offsets = [0, 128], sizes = [16, 128], strides = [1, 1]} : vector<16x384xf32> to vector<16x128xf32>
    %21 = vector.extract_strided_slice %9 {offsets = [0, 128], sizes = [16, 128], strides = [1, 1]} : vector<16x256xf32> to vector<16x128xf32>
    %22 = arith.addf %20, %21 : vector<16x128xf32>
    %cst_13 = arith.constant 5.000000e-01 : f32
    %23 = vector.broadcast %cst_13 : f32 to vector<16x128xf32>
    %24 = arith.mulf %23, %22 : vector<16x128xf32>
    %25 = math.tanh %24 : vector<16x128xf32>
    %cst_14 = arith.constant 1.000000e+00 : f32
    %26 = vector.broadcast %cst_14 : f32 to vector<16x128xf32>
    %27 = arith.addf %25, %26 : vector<16x128xf32>
    %cst_15 = arith.constant 5.000000e-01 : f32
    %28 = vector.broadcast %cst_15 : f32 to vector<16x128xf32>
    %29 = arith.mulf %28, %27 : vector<16x128xf32>
    %30 = arith.mulf %29, %1 : vector<16x128xf32>
    %31 = arith.truncf %30 : vector<16x128xf32> to vector<16x128xbf16>
    %32 = vector.extract_strided_slice %7 {offsets = [0, 256], sizes = [16, 128], strides = [1, 1]} : vector<16x384xf32> to vector<16x128xf32>
    %c0_16 = arith.constant 0 : index
    %c0_17 = arith.constant 0 : index
    %33 = vector.load %arg6[%c0_16, %c0_17] : memref<128x128xbf16, #tpu.memory_space<vmem>>, vector<128x128xbf16>
    %cst_18 = arith.constant dense<0.000000e+00> : vector<16x128xf32>
    %34 = tpu.matmul %31, %33, %cst_18 {dimension_numbers = #tpu.dot_dimension_numbers<[1], [0], [0], [1], [0, 0, 1, 1], [], []>} : vector<16x128xbf16>, vector<128x128xbf16>, vector<16x128xf32> -> vector<16x128xf32>
    %35 = arith.addf %32, %34 : vector<16x128xf32>
    %c0_19 = arith.constant 0 : index
    %c0_20 = arith.constant 0 : index
    %36 = vector.load %arg7[%c0_19, %c0_20] : memref<1x128xf32, #tpu.memory_space<vmem>>, vector<1x128xf32>
    %37 = vector.broadcast %36 : vector<1x128xf32> to vector<16x128xf32>
    %38 = arith.addf %35, %37 : vector<16x128xf32>
    %39 = math.tanh %38 : vector<16x128xf32>
    %40 = arith.subf %39, %1 : vector<16x128xf32>
    %41 = arith.mulf %19, %40 : vector<16x128xf32>
    %42 = arith.addf %1, %41 : vector<16x128xf32>
    %c0_21 = arith.constant 0 : index
    %c0_22 = arith.constant 0 : index
    %43 = vector.load %arg8[%c0_21, %c0_22] : memref<16x128xf32, #tpu.memory_space<vmem>>, vector<16x128xf32>
    tpu.vector_store %arg8[%c0_21, %c0_22], %42 {strides = array<i32>} : memref<16x128xf32, #tpu.memory_space<vmem>>, vector<16x128xf32>,
    return
  }
  func.func @transform_0(%arg0: i32) -> (i32, i32) {
    %c0_i32 = arith.constant 0 : i32
    %c0_i32_0 = arith.constant 0 : i32
    return %arg0, %c0_i32 : i32, i32
  }
  func.func @transform_1(%arg0: i32) -> (i32, i32) {
    %c0_i32 = arith.constant 0 : i32
    %c0_i32_0 = arith.constant 0 : i32
    return %arg0, %c0_i32 : i32, i32
  }
  func.func @transform_2(%arg0: i32) -> (i32, i32) {
    %c0_i32 = arith.constant 0 : i32
    %c0_i32_0 = arith.constant 0 : i32
    %c0_i32_1 = arith.constant 0 : i32
    return %c0_i32, %c0_i32_0 : i32, i32
  }
  func.func @transform_3(%arg0: i32) -> (i32, i32) {
    %c0_i32 = arith.constant 0 : i32
    %c0_i32_0 = arith.constant 0 : i32
    %c0_i32_1 = arith.constant 0 : i32
    return %c0_i32, %c0_i32_0 : i32, i32
  }
  func.func @transform_4(%arg0: i32) -> (i32, i32) {
    %c0_i32 = arith.constant 0 : i32
    %c0_i32_0 = arith.constant 0 : i32
    %c0_i32_1 = arith.constant 0 : i32
    return %c0_i32, %c0_i32_0 : i32, i32
  }
  func.func @transform_5(%arg0: i32) -> (i32, i32) {
    %c0_i32 = arith.constant 0 : i32
    %c0_i32_0 = arith.constant 0 : i32
    %c0_i32_1 = arith.constant 0 : i32
    return %c0_i32, %c0_i32_0 : i32, i32
  }
  func.func @transform_6(%arg0: i32) -> (i32, i32) {
    %c0_i32 = arith.constant 0 : i32
    %c0_i32_0 = arith.constant 0 : i32
    %c0_i32_1 = arith.constant 0 : i32
    return %c0_i32, %c0_i32_0 : i32, i32
  }
  func.func @transform_7(%arg0: i32) -> (i32, i32) {
    %c0_i32 = arith.constant 0 : i32
    %c0_i32_0 = arith.constant 0 : i32
    return %arg0, %c0_i32 : i32, i32
  }
}

</mosaic_0001>

<llo_original>
// kernel: tpu_custom_call.1
$region0: #{tpu_custom_call.1}
  #allocation0 [shape = 'u32[]', space=smem, size = 0x4, offset = 0x4, fixed_abs, tag = 'smem constant byte address 0x4 - core index']
  #allocation1 [shape = 'u32[144,128]{1,0:T(1,128)}', space=vmem, size = 0x12000, scoped, tag = 'internal scratch']
  %s0 = inlined_call_operand.hbm [shape: bf16[16,128], index: 0, kind: input, shape index: {}]
  %s1 = inlined_call_operand.hbm [shape: f32[16,128], index: 1, kind: input, shape index: {}]
  %s2 = inlined_call_operand.hbm [shape: bf16[128,384], index: 2, kind: input, shape index: {}]
  %s3 = inlined_call_operand.vmem [shape: f32[1,384], index: 3, kind: input, shape index: {}]
  %s4 = inlined_call_operand.hbm [shape: bf16[128,256], index: 4, kind: input, shape index: {}]
  %s5 = inlined_call_operand.hbm [shape: bf16[128,128], index: 5, kind: input, shape index: {}]
  %s6 = inlined_call_operand.vmem [shape: f32[1,128], index: 6, kind: input, shape index: {}]
  %s7 = inlined_call_operand.hbm [shape: f32[16,128], index: 7, kind: output, shape index: {}]
  %s8 = sld [smem:[#allocation0]]
  $region58: #{tpu_custom_call.1} parent=0
    _
  %s10 = ssub.s32 1, %s8
  %s11 = scalar_select 0, %s10, %s8
  $region1: #{tpu_custom_call.1} parent=0
    #allocation2 [shape = 'u8[4096]{0}', space=vmem, size = 0x1000, scoped, tag = 'input window, operand 0, single buffered']
    #allocation3 [shape = 's32[1]{0}', space=sflag, size = 0x4, scoped, tag = 'scoped memory for tpu_custom_call.1']
    #allocation4 [shape = 's32[1]{0}', space=sflag, size = 0x4, scoped, tag = 'scoped memory for tpu_custom_call.1']
    #allocation5 [shape = 'u8[8192]{0}', space=vmem, size = 0x2000, scoped, tag = 'input window, operand 1, single buffered']
    #allocation6 [shape = 's32[1]{0}', space=sflag, size = 0x4, scoped, tag = 'scoped memory for tpu_custom_call.1']
    #allocation7 [shape = 'u8[98304]{0}', space=vmem, size = 0x18000, scoped, tag = 'input window, operand 2, single buffered']
    #allocation8 [shape = 'u8[65536]{0}', space=vmem, size = 0x10000, scoped, tag = 'input window, operand 4, single buffered']
    #allocation9 [shape = 's32[1]{0}', space=sflag, size = 0x4, scoped, tag = 'scoped memory for tpu_custom_call.1']
    #allocation10 [shape = 'u8[32768]{0}', space=vmem, size = 0x8000, scoped, tag = 'input window, operand 5, single buffered']
    #allocation11 [shape = 'u8[8192]{0}', space=vmem, size = 0x2000, scoped, tag = 'output window, operand 0, single buffered']
    %12 = vsyncpa [#allocation3], 0
    %13 = vsyncpa [#allocation6], 0
    %14 = vsyncpa [#allocation9], 0
    %15 = vsyncpa [#allocation4], 0
    // Predicated region
    $region2: #{tpu_custom_call.1} parent=1 // pred_check
      _
    $region3: #{tpu_custom_call.1} parent=1 // pred_check_branch
      %17 = sbr.rel (0) target = $region5
    $region4: #{tpu_custom_call.1} parent=1 // pred_region
      %s19 = ssub.s32 128, 128
      %20 = vsyncadd [#allocation3], %s19
      %s21 = sshll.u32 [#allocation2], 4
      %s22 = int_to_ptr.vmem [resolvable:$true] %s21
      %27 = dma.hbm_to_vmem [thread:$0]  %s0, 128, %s22, [#allocation3], 64, 64, 4
    $region5: #{tpu_custom_call.1} parent=1 // pred_fallthru
      _
    // Predicated region
    $region6: #{tpu_custom_call.1} parent=1 // pred_check
      _
    $region7: #{tpu_custom_call.1} parent=1 // pred_check_branch
      %29 = sbr.rel (0) target = $region9
    $region8: #{tpu_custom_call.1} parent=1 // pred_region
      %s31 = ssub.s32 256, 256
      %32 = vsyncadd [#allocation6], %s31
      %s33 = sshll.u32 [#allocation5], 4
      %s34 = int_to_ptr.vmem [resolvable:$true] %s33
      %39 = dma.hbm_to_vmem [thread:$0]  %s1, 256, %s34, [#allocation6], 128, 128, 8
    $region9: #{tpu_custom_call.1} parent=1 // pred_fallthru
      _
    // Predicated region
    $region10: #{tpu_custom_call.1} parent=1 // pred_check
      _
    $region11: #{tpu_custom_call.1} parent=1 // pred_check_branch
      %41 = sbr.rel (0) target = $region13
    $region12: #{tpu_custom_call.1} parent=1 // pred_region
      %s43 = ssub.s32 3072, 3072
      %44 = vsyncadd [#allocation6], %s43
      %s45 = sshll.u32 [#allocation7], 4
      %s46 = int_to_ptr.vmem [resolvable:$true] %s45
      %51 = dma.hbm_to_vmem [thread:$0]  %s2, 3072, %s46, [#allocation6], 192, 192, 12
    $region13: #{tpu_custom_call.1} parent=1 // pred_fallthru
      _
    // Predicated region
    $region14: #{tpu_custom_call.1} parent=1 // pred_check
      _
    $region15: #{tpu_custom_call.1} parent=1 // pred_check_branch
      %53 = sbr.rel (0) target = $region17
    $region16: #{tpu_custom_call.1} parent=1 // pred_region
      _
    $region17: #{tpu_custom_call.1} parent=1 // pred_fallthru
      _
    // Predicated region
    $region18: #{tpu_custom_call.1} parent=1 // pred_check
      _
    $region19: #{tpu_custom_call.1} parent=1 // pred_check_branch
      %55 = sbr.rel (0) target = $region21
    $region20: #{tpu_custom_call.1} parent=1 // pred_region
      %s57 = ssub.s32 2048, 2048
      %58 = vsyncadd [#allocation9], %s57
      %s59 = sshll.u32 [#allocation8], 4
      %s60 = int_to_ptr.vmem [resolvable:$true] %s59
      %65 = dma.hbm_to_vmem [thread:$0]  %s4, 2048, %s60, [#allocation9], 128, 128, 8
    $region21: #{tpu_custom_call.1} parent=1 // pred_fallthru
      _
    // Predicated region
    $region22: #{tpu_custom_call.1} parent=1 // pred_check
      _
    $region23: #{tpu_custom_call.1} parent=1 // pred_check_branch
      %67 = sbr.rel (0) target = $region25
    $region24: #{tpu_custom_call.1} parent=1 // pred_region
      %s69 = ssub.s32 1024, 1024
      %70 = vsyncadd [#allocation9], %s69
      %s71 = sshll.u32 [#allocation10], 4
      %s72 = int_to_ptr.vmem [resolvable:$true] %s71
      %77 = dma.hbm_to_vmem [thread:$0]  %s5, 1024, %s72, [#allocation9], 64, 64, 4
    $region25: #{tpu_custom_call.1} parent=1 // pred_fallthru
      _
    // Predicated region
    $region26: #{tpu_custom_call.1} parent=1 // pred_check
      _
    $region27: #{tpu_custom_call.1} parent=1 // pred_check_branch
      %79 = sbr.rel (0) target = $region29
    $region28: #{tpu_custom_call.1} parent=1 // pred_region
      _
    $region29: #{tpu_custom_call.1} parent=1 // pred_fallthru
      _
    // Predicated region
    $region30: #{tpu_custom_call.1} parent=1 // pred_check
      _
    $region31: #{tpu_custom_call.1} parent=1 // pred_check_branch
      %81 = sbr.rel (0) target = $region33
    $region32: #{tpu_custom_call.1} parent=1 // pred_region
      %82 = dma.done [#allocation3], 128
    $region33: #{tpu_custom_call.1} parent=1 // pred_fallthru
      _
    // Predicated region
    $region34: #{tpu_custom_call.1} parent=1 // pred_check
      _
    $region35: #{tpu_custom_call.1} parent=1 // pred_check_branch
      %84 = sbr.rel (0) target = $region37
    $region36: #{tpu_custom_call.1} parent=1 // pred_region
      %85 = dma.done [#allocation6], 256
    $region37: #{tpu_custom_call.1} parent=1 // pred_fallthru
      _
    // Predicated region
    $region38: #{tpu_custom_call.1} parent=1 // pred_check
      _
    $region39: #{tpu_custom_call.1} parent=1 // pred_check_branch
      %87 = sbr.rel (0) target = $region41
    $region40: #{tpu_custom_call.1} parent=1 // pred_region
      %88 = dma.done [#allocation6], 3072
    $region41: #{tpu_custom_call.1} parent=1 // pred_fallthru
      _
    // Predicated region
    $region42: #{tpu_custom_call.1} parent=1 // pred_check
      _
    $region43: #{tpu_custom_call.1} parent=1 // pred_check_branch
      %90 = sbr.rel (0) target = $region45
    $region44: #{tpu_custom_call.1} parent=1 // pred_region
      %91 = dma.done [#allocation9], 2048
    $region45: #{tpu_custom_call.1} parent=1 // pred_fallthru
      _
    // Predicated region
    $region46: #{tpu_custom_call.1} parent=1 // pred_check
      _
    $region47: #{tpu_custom_call.1} parent=1 // pred_check_branch
      %93 = sbr.rel (0) target = $region49
    $region48: #{tpu_custom_call.1} parent=1 // pred_region
      %94 = dma.done [#allocation9], 1024
    $region49: #{tpu_custom_call.1} parent=1 // pred_fallthru
      _
    %v96 = vld [vmem:[#allocation2] sm:$0xf]
    %v97 = vld [vmem:[#allocation2 + $0x4] sm:$0xf]
    %v98 = vld [vmem:[#allocation5] sm:$0xff]
    %v99 = vld [vmem:[#allocation5 + $0x8] sm:$0xff]
    %v100 = vpack.c.bf16 %v99, %v98
    %v101 = vld [vmem:[#allocation7] sm:$0xff]
    %v102 = vld [vmem:[#allocation7 + $0x8] sm:$0xf]
    %v103 = vld [vmem:[#allocation7 + $0xc] sm:$0xff]
    %v104 = vld [vmem:[#allocation7 + $0x14] sm:$0xf]
    %v105 = vld [vmem:[#allocation7 + $0x18] sm:$0xff]
    %v106 = vld [vmem:[#allocation7 + $0x20] sm:$0xf]
    %v107 = vld [vmem:[#allocation7 + $0x24] sm:$0xff]
    %v108 = vld [vmem:[#allocation7 + $0x2c] sm:$0xf]
    %v109 = vld [vmem:[#allocation7 + $0x30] sm:$0xff]
    %v110 = vld [vmem:[#allocation7 + $0x38] sm:$0xf]
    %v111 = vld [vmem:[#allocation7 + $0x3c] sm:$0xff]
    %v112 = vld [vmem:[#allocation7 + $0x44] sm:$0xf]
    %v113 = vld [vmem:[#allocation7 + $0x48] sm:$0xff]
    %v114 = vld [vmem:[#allocation7 + $0x50] sm:$0xf]
    %v115 = vld [vmem:[#allocation7 + $0x54] sm:$0xff]
    %v116 = vld [vmem:[#allocation7 + $0x5c] sm:$0xf]
    %v117 = vld [vmem:[#allocation7 + $0x60] sm:$0xff]
    %v118 = vld [vmem:[#allocation7 + $0x68] sm:$0xf]
    %v119 = vld [vmem:[#allocation7 + $0x6c] sm:$0xff]
    %v120 = vld [vmem:[#allocation7 + $0x74] sm:$0xf]
    %v121 = vld [vmem:[#allocation7 + $0x78] sm:$0xff]
    %v122 = vld [vmem:[#allocation7 + $0x80] sm:$0xf]
    %v123 = vld [vmem:[#allocation7 + $0x84] sm:$0xff]
    %v124 = vld [vmem:[#allocation7 + $0x8c] sm:$0xf]
    %v125 = vld [vmem:[#allocation7 + $0x90] sm:$0xff]
    %v126 = vld [vmem:[#allocation7 + $0x98] sm:$0xf]
    %v127 = vld [vmem:[#allocation7 + $0x9c] sm:$0xff]
    %v128 = vld [vmem:[#allocation7 + $0xa4] sm:$0xf]
    %v129 = vld [vmem:[#allocation7 + $0xa8] sm:$0xff]
    %v130 = vld [vmem:[#allocation7 + $0xb0] sm:$0xf]
    %v131 = vld [vmem:[#allocation7 + $0xb4] sm:$0xff]
    %v132 = vld [vmem:[#allocation7 + $0xbc] sm:$0xf]
    %v133 = vld [vmem:[%s3] sm:$0x7]
    %v135 = vlaneseq
    %v136 = vshrl.u32 %v135, 7
    %v137 = vsub.s32 0, %v136
    %v138 = vrot.slane %v133, %v137
    %v139 = vlaneseq
    %v140 = vshrl.u32 %v139, 7
    %v141 = vsub.s32 1, %v140
    %v142 = vrot.slane %v133, %v141
    %v143 = vlaneseq
    %v144 = vshrl.u32 %v143, 7
    %v145 = vsub.s32 2, %v144
    %v146 = vrot.slane %v133, %v145
    %v152 = vunpack.c.l.b16 %v96
    %v153 = vunpack.c.l.b16 %v97
    %v154 = vpack.c.b16 %v153, %v152
    %v188 = vunpack.c.l.b16 %v101
    %v189 = vunpack.c.h.b16 %v101
    %v190 = vunpack.c.l.b16 %v102
    %v191 = vunpack.c.l.b16 %v103
    %v192 = vunpack.c.h.b16 %v103
    %v193 = vunpack.c.l.b16 %v104
    %v194 = vunpack.c.l.b16 %v105
    %v195 = vunpack.c.h.b16 %v105
    %v196 = vunpack.c.l.b16 %v106
    %v197 = vunpack.c.l.b16 %v107
    %v198 = vunpack.c.h.b16 %v107
    %v199 = vunpack.c.l.b16 %v108
    %v200 = vunpack.c.l.b16 %v109
    %v201 = vunpack.c.h.b16 %v109
    %v202 = vunpack.c.l.b16 %v110
    %v203 = vunpack.c.l.b16 %v111
    %v204 = vunpack.c.h.b16 %v111
    %v205 = vunpack.c.l.b16 %v112
    %v206 = vunpack.c.l.b16 %v113
    %v207 = vunpack.c.h.b16 %v113
    %v208 = vunpack.c.l.b16 %v114
    %v209 = vunpack.c.l.b16 %v115
    %v210 = vunpack.c.h.b16 %v115
    %v211 = vunpack.c.l.b16 %v116
    %v212 = vunpack.c.l.b16 %v117
    %v213 = vunpack.c.h.b16 %v117
    %v214 = vunpack.c.l.b16 %v118
    %v215 = vunpack.c.l.b16 %v119
    %v216 = vunpack.c.h.b16 %v119
    %v217 = vunpack.c.l.b16 %v120
    %v218 = vunpack.c.l.b16 %v121
    %v219 = vunpack.c.h.b16 %v121
    %v220 = vunpack.c.l.b16 %v122
    %v221 = vunpack.c.l.b16 %v123
    %v222 = vunpack.c.h.b16 %v123
    %v223 = vunpack.c.l.b16 %v124
    %v224 = vunpack.c.l.b16 %v125
    %v225 = vunpack.c.h.b16 %v125
    %v226 = vunpack.c.l.b16 %v126
    %v227 = vunpack.c.l.b16 %v127
    %v228 = vunpack.c.h.b16 %v127
    %v229 = vunpack.c.l.b16 %v128
    %v230 = vunpack.c.l.b16 %v129
    %v231 = vunpack.c.h.b16 %v129
    %v232 = vunpack.c.l.b16 %v130
    %v233 = vunpack.c.l.b16 %v131
    %v234 = vunpack.c.h.b16 %v131
    %v235 = vunpack.c.l.b16 %v132
    %v236 = vpack.c.b16 %v191, %v188
    %v237 = vpack.c.b16 %v192, %v189
    %v238 = vpack.c.b16 %v193, %v190
    %v239 = vpack.c.b16 %v197, %v194
    %v240 = vpack.c.b16 %v198, %v195
    %v241 = vpack.c.b16 %v199, %v196
    %v242 = vpack.c.b16 %v203, %v200
    %v243 = vpack.c.b16 %v204, %v201
    %v244 = vpack.c.b16 %v205, %v202
    %v245 = vpack.c.b16 %v209, %v206
    %v246 = vpack.c.b16 %v210, %v207
    %v247 = vpack.c.b16 %v211, %v208
    %v248 = vpack.c.b16 %v215, %v212
    %v249 = vpack.c.b16 %v216, %v213
    %v250 = vpack.c.b16 %v217, %v214
    %v251 = vpack.c.b16 %v221, %v218
    %v252 = vpack.c.b16 %v222, %v219
    %v253 = vpack.c.b16 %v223, %v220
    %v254 = vpack.c.b16 %v227, %v224
    %v255 = vpack.c.b16 %v228, %v225
    %v256 = vpack.c.b16 %v229, %v226
    %v257 = vpack.c.b16 %v233, %v230
    %v258 = vpack.c.b16 %v234, %v231
    %v259 = vpack.c.b16 %v235, %v232
    %284 = vmatprep.subr.bf16.mxu0 %v237
    %285 = vmatpush1.bf16.msra.mxu0 %v236
    %286 = vmatprep.subr.bf16.mxu0 %v240
    %287 = vmatpush1.bf16.msra.mxu0 %v239
    %288 = vmatprep.subr.bf16.mxu0 %v243
    %289 = vmatpush1.bf16.msra.mxu0 %v242
    %290 = vmatprep.subr.bf16.mxu0 %v246
    %291 = vmatpush1.bf16.msra.mxu0 %v245
    %292 = vmatprep.subr.bf16.mxu0 %v249
    %293 = vmatpush1.bf16.msra.mxu0 %v248
    %294 = vmatprep.subr.bf16.mxu0 %v252
    %295 = vmatpush1.bf16.msra.mxu0 %v251
    %296 = vmatprep.subr.bf16.mxu0 %v255
    %297 = vmatpush1.bf16.msra.mxu0 %v254
    %298 = vmatprep.subr.bf16.mxu0 %v258
    %299 = vmatpush1.bf16.msra.mxu0 %v257
    %300 = vmatprep.subr.bf16.mxu0 0
    %301 = vmatpush1.bf16.msra.mxu0 0
    %302 = vmatprep.subr.bf16.mxu0 0
    %303 = vmatpush1.bf16.msra.mxu0 0
    %304 = vmatprep.subr.bf16.mxu0 0
    %305 = vmatpush1.bf16.msra.mxu0 0
    %306 = vmatprep.subr.bf16.mxu0 0
    %307 = vmatpush1.bf16.msra.mxu0 0
    %308 = vmatprep.subr.bf16.mxu0 0
    %309 = vmatpush1.bf16.msra.mxu0 0
    %310 = vmatprep.subr.bf16.mxu0 0
    %311 = vmatpush1.bf16.msra.mxu0 0
    %312 = vmatprep.subr.bf16.mxu0 0
    %313 = vmatpush1.bf16.msra.mxu0 0
    %314 = vmatprep.subr.bf16.mxu0 0
    %315 = vmatpush1.bf16.msra.mxu0 0
    %316 = vmatprep.mubr.bf16.mxu0 0
    %317 = vmatmul.mubr.bf16.gmra.mrb[0].mxu0 %v154
    %v318 = vpop.f32.mrb[0].mxu0
    %v319 = vadd.f32 %v138, %v318
    %v320 = vpop.f32.mrb[0].mxu0
    %v321 = vadd.f32 %v142, %v320
    %v322 = vpop.f32.mrb[0].mxu0
    %v323 = vadd.f32 %v138, %v322
    %v324 = vpop.f32.mrb[0].mxu0
    %v325 = vadd.f32 %v142, %v324
    %326 = vdwg.mxu0
    %327 = vmatprep.subr.bf16.mxu0 0
    %328 = vmatpush1.bf16.msra.mxu0 %v238
    %329 = vmatprep.subr.bf16.mxu0 0
    %330 = vmatpush1.bf16.msra.mxu0 %v241
    %331 = vmatprep.subr.bf16.mxu0 0
    %332 = vmatpush1.bf16.msra.mxu0 %v244
    %333 = vmatprep.subr.bf16.mxu0 0
    %334 = vmatpush1.bf16.msra.mxu0 %v247
    %335 = vmatprep.subr.bf16.mxu0 0
    %336 = vmatpush1.bf16.msra.mxu0 %v250
    %337 = vmatprep.subr.bf16.mxu0 0
    %338 = vmatpush1.bf16.msra.mxu0 %v253
    %339 = vmatprep.subr.bf16.mxu0 0
    %340 = vmatpush1.bf16.msra.mxu0 %v256
    %341 = vmatprep.subr.bf16.mxu0 0
    %342 = vmatpush1.bf16.msra.mxu0 %v259
    %343 = vmatprep.subr.bf16.mxu0 0
    %344 = vmatpush1.bf16.msra.mxu0 0
    %345 = vmatprep.subr.bf16.mxu0 0
    %346 = vmatpush1.bf16.msra.mxu0 0
    %347 = vmatprep.subr.bf16.mxu0 0
    %348 = vmatpush1.bf16.msra.mxu0 0
    %349 = vmatprep.subr.bf16.mxu0 0
    %350 = vmatpush1.bf16.msra.mxu0 0
    %351 = vmatprep.subr.bf16.mxu0 0
    %352 = vmatpush1.bf16.msra.mxu0 0
    %353 = vmatprep.subr.bf16.mxu0 0
    %354 = vmatpush1.bf16.msra.mxu0 0
    %355 = vmatprep.subr.bf16.mxu0 0
    %356 = vmatpush1.bf16.msra.mxu0 0
    %357 = vmatprep.subr.bf16.mxu0 0
    %358 = vmatpush1.bf16.msra.mxu0 0
    %359 = vmatprep.mubr.bf16.mxu0 0
    %360 = vmatmul.mubr.bf16.gmra.mrb[0].mxu0 %v154
    %v361 = vpop.f32.mrb[0].mxu0
    %v362 = vadd.f32 %v146, %v361
    %v363 = vpop.f32.mrb[0].mxu0
    %v364 = vpop.f32.mrb[0].mxu0
    %v365 = vadd.f32 %v146, %v364
    %v366 = vpop.f32.mrb[0].mxu0
    %367 = vdwg.mxu0
    %v368 = vld [vmem:[#allocation8] sm:$0xff]
    %v369 = vld [vmem:[#allocation8 + $0x8] sm:$0xff]
    %v370 = vld [vmem:[#allocation8 + $0x10] sm:$0xff]
    %v371 = vld [vmem:[#allocation8 + $0x18] sm:$0xff]
    %v372 = vld [vmem:[#allocation8 + $0x20] sm:$0xff]
    %v373 = vld [vmem:[#allocation8 + $0x28] sm:$0xff]
    %v374 = vld [vmem:[#allocation8 + $0x30] sm:$0xff]
    %v375 = vld [vmem:[#allocation8 + $0x38] sm:$0xff]
    %v376 = vld [vmem:[#allocation8 + $0x40] sm:$0xff]
    %v377 = vld [vmem:[#allocation8 + $0x48] sm:$0xff]
    %v378 = vld [vmem:[#allocation8 + $0x50] sm:$0xff]
    %v379 = vld [vmem:[#allocation8 + $0x58] sm:$0xff]
    %v380 = vld [vmem:[#allocation8 + $0x60] sm:$0xff]
    %v381 = vld [vmem:[#allocation8 + $0x68] sm:$0xff]
    %v382 = vld [vmem:[#allocation8 + $0x70] sm:$0xff]
    %v383 = vld [vmem:[#allocation8 + $0x78] sm:$0xff]
    %v400 = vunpack.c.l.b16 %v368
    %v401 = vunpack.c.h.b16 %v368
    %v402 = vunpack.c.l.b16 %v369
    %v403 = vunpack.c.h.b16 %v369
    %v404 = vunpack.c.l.b16 %v370
    %v405 = vunpack.c.h.b16 %v370
    %v406 = vunpack.c.l.b16 %v371
    %v407 = vunpack.c.h.b16 %v371
    %v408 = vunpack.c.l.b16 %v372
    %v409 = vunpack.c.h.b16 %v372
    %v410 = vunpack.c.l.b16 %v373
    %v411 = vunpack.c.h.b16 %v373
    %v412 = vunpack.c.l.b16 %v374
    %v413 = vunpack.c.h.b16 %v374
    %v414 = vunpack.c.l.b16 %v375
    %v415 = vunpack.c.h.b16 %v375
    %v416 = vunpack.c.l.b16 %v376
    %v417 = vunpack.c.h.b16 %v376
    %v418 = vunpack.c.l.b16 %v377
    %v419 = vunpack.c.h.b16 %v377
    %v420 = vunpack.c.l.b16 %v378
    %v421 = vunpack.c.h.b16 %v378
    %v422 = vunpack.c.l.b16 %v379
    %v423 = vunpack.c.h.b16 %v379
    %v424 = vunpack.c.l.b16 %v380
    %v425 = vunpack.c.h.b16 %v380
    %v426 = vunpack.c.l.b16 %v381
    %v427 = vunpack.c.h.b16 %v381
    %v428 = vunpack.c.l.b16 %v382
    %v429 = vunpack.c.h.b16 %v382
    %v430 = vunpack.c.l.b16 %v383
    %v431 = vunpack.c.h.b16 %v383
    %v432 = vpack.c.b16 %v402, %v400
    %v433 = vpack.c.b16 %v403, %v401
    %v434 = vpack.c.b16 %v406, %v404
    %v435 = vpack.c.b16 %v407, %v405
    %v436 = vpack.c.b16 %v410, %v408
    %v437 = vpack.c.b16 %v411, %v409
    %v438 = vpack.c.b16 %v414, %v412
    %v439 = vpack.c.b16 %v415, %v413
    %v440 = vpack.c.b16 %v418, %v416
    %v441 = vpack.c.b16 %v419, %v417
    %v442 = vpack.c.b16 %v422, %v420
    %v443 = vpack.c.b16 %v423, %v421
    %v444 = vpack.c.b16 %v426, %v424
    %v445 = vpack.c.b16 %v427, %v425
    %v446 = vpack.c.b16 %v430, %v428
    %v447 = vpack.c.b16 %v431, %v429
    %464 = vmatprep.subr.bf16.mxu0 %v433
    %465 = vmatpush1.bf16.msra.mxu0 %v432
    %466 = vmatprep.subr.bf16.mxu0 %v435
    %467 = vmatpush1.bf16.msra.mxu0 %v434
    %468 = vmatprep.subr.bf16.mxu0 %v437
    %469 = vmatpush1.bf16.msra.mxu0 %v436
    %470 = vmatprep.subr.bf16.mxu0 %v439
    %471 = vmatpush1.bf16.msra.mxu0 %v438
    %472 = vmatprep.subr.bf16.mxu0 %v441
    %473 = vmatpush1.bf16.msra.mxu0 %v440
    %474 = vmatprep.subr.bf16.mxu0 %v443
    %475 = vmatpush1.bf16.msra.mxu0 %v442
    %476 = vmatprep.subr.bf16.mxu0 %v445
    %477 = vmatpush1.bf16.msra.mxu0 %v444
    %478 = vmatprep.subr.bf16.mxu0 %v447
    %479 = vmatpush1.bf16.msra.mxu0 %v446
    %480 = vmatprep.subr.bf16.mxu0 0
    %481 = vmatpush1.bf16.msra.mxu0 0
    %482 = vmatprep.subr.bf16.mxu0 0
    %483 = vmatpush1.bf16.msra.mxu0 0
    %484 = vmatprep.subr.bf16.mxu0 0
    %485 = vmatpush1.bf16.msra.mxu0 0
    %486 = vmatprep.subr.bf16.mxu0 0
    %487 = vmatpush1.bf16.msra.mxu0 0
    %488 = vmatprep.subr.bf16.mxu0 0
    %489 = vmatpush1.bf16.msra.mxu0 0
    %490 = vmatprep.subr.bf16.mxu0 0
    %491 = vmatpush1.bf16.msra.mxu0 0
    %492 = vmatprep.subr.bf16.mxu0 0
    %493 = vmatpush1.bf16.msra.mxu0 0
    %494 = vmatprep.subr.bf16.mxu0 0
    %495 = vmatpush1.bf16.msra.mxu0 0
    %496 = vmatprep.mubr.bf16.mxu0 0
    %497 = vmatmul.mubr.bf16.gmra.mrb[0].mxu0 %v100
    %v498 = vpop.f32.mrb[0].mxu0
    %v499 = vadd.f32 0.0, %v498
    %v500 = vpop.f32.mrb[0].mxu0
    %v501 = vadd.f32 0.0, %v500
    %v502 = vpop.f32.mrb[0].mxu0
    %v503 = vadd.f32 0.0, %v502
    %v504 = vpop.f32.mrb[0].mxu0
    %v505 = vadd.f32 0.0, %v504
    %506 = vdwg.mxu0
    %v507 = vadd.f32 %v319, %v499
    %v508 = vadd.f32 %v323, %v503
    %v509 = vmul.f32 %v507, 0.5
    %v510 = vmul.f32 %v508, 0.5
    %v511 = vtanh.pop %v509
    %v512 = vtanh.pop %v510
    %v513 = vadd.f32 %v511, 1.0
    %v514 = vadd.f32 %v512, 1.0
    %v515 = vmul.f32 %v513, 0.5
    %v516 = vmul.f32 %v514, 0.5
    %v517 = vadd.f32 %v321, %v501
    %v518 = vadd.f32 %v325, %v505
    %v519 = vmul.f32 %v517, 0.5
    %v520 = vmul.f32 %v518, 0.5
    %v521 = vtanh.pop %v519
    %v522 = vtanh.pop %v520
    %v523 = vadd.f32 %v521, 1.0
    %v524 = vadd.f32 %v522, 1.0
    %v525 = vmul.f32 %v523, 0.5
    %v526 = vmul.f32 %v524, 0.5
    %v527 = vmul.f32 %v525, %v98
    %v528 = vmul.f32 %v526, %v99
    %v529 = vpack.c.bf16 %v528, %v527
    %v530 = vld [vmem:[#allocation10] sm:$0xf]
    %v531 = vld [vmem:[#allocation10 + $0x4] sm:$0xf]
    %v532 = vld [vmem:[#allocation10 + $0x8] sm:$0xf]
    %v533 = vld [vmem:[#allocation10 + $0xc] sm:$0xf]
    %v534 = vld [vmem:[#allocation10 + $0x10] sm:$0xf]
    %v535 = vld [vmem:[#allocation10 + $0x14] sm:$0xf]
    %v536 = vld [vmem:[#allocation10 + $0x18] sm:$0xf]
    %v537 = vld [vmem:[#allocation10 + $0x1c] sm:$0xf]
    %v538 = vld [vmem:[#allocation10 + $0x20] sm:$0xf]
    %v539 = vld [vmem:[#allocation10 + $0x24] sm:$0xf]
    %v540 = vld [vmem:[#allocation10 + $0x28] sm:$0xf]
    %v541 = vld [vmem:[#allocation10 + $0x2c] sm:$0xf]
    %v542 = vld [vmem:[#allocation10 + $0x30] sm:$0xf]
    %v543 = vld [vmem:[#allocation10 + $0x34] sm:$0xf]
    %v544 = vld [vmem:[#allocation10 + $0x38] sm:$0xf]
    %v545 = vld [vmem:[#allocation10 + $0x3c] sm:$0xf]
    %v562 = vunpack.c.l.b16 %v530
    %v563 = vunpack.c.l.b16 %v531
    %v564 = vunpack.c.l.b16 %v532
    %v565 = vunpack.c.l.b16 %v533
    %v566 = vunpack.c.l.b16 %v534
    %v567 = vunpack.c.l.b16 %v535
    %v568 = vunpack.c.l.b16 %v536
    %v569 = vunpack.c.l.b16 %v537
    %v570 = vunpack.c.l.b16 %v538
    %v571 = vunpack.c.l.b16 %v539
    %v572 = vunpack.c.l.b16 %v540
    %v573 = vunpack.c.l.b16 %v541
    %v574 = vunpack.c.l.b16 %v542
    %v575 = vunpack.c.l.b16 %v543
    %v576 = vunpack.c.l.b16 %v544
    %v577 = vunpack.c.l.b16 %v545
    %v578 = vpack.c.b16 %v563, %v562
    %v579 = vpack.c.b16 %v565, %v564
    %v580 = vpack.c.b16 %v567, %v566
    %v581 = vpack.c.b16 %v569, %v568
    %v582 = vpack.c.b16 %v571, %v570
    %v583 = vpack.c.b16 %v573, %v572
    %v584 = vpack.c.b16 %v575, %v574
    %v585 = vpack.c.b16 %v577, %v576
    %594 = vmatprep.subr.bf16.mxu0 0
    %595 = vmatpush1.bf16.msra.mxu0 %v578
    %596 = vmatprep.subr.bf16.mxu0 0
    %597 = vmatpush1.bf16.msra.mxu0 %v579
    %598 = vmatprep.subr.bf16.mxu0 0
    %599 = vmatpush1.bf16.msra.mxu0 %v580
    %600 = vmatprep.subr.bf16.mxu0 0
    %601 = vmatpush1.bf16.msra.mxu0 %v581
    %602 = vmatprep.subr.bf16.mxu0 0
    %603 = vmatpush1.bf16.msra.mxu0 %v582
    %604 = vmatprep.subr.bf16.mxu0 0
    %605 = vmatpush1.bf16.msra.mxu0 %v583
    %606 = vmatprep.subr.bf16.mxu0 0
    %607 = vmatpush1.bf16.msra.mxu0 %v584
    %608 = vmatprep.subr.bf16.mxu0 0
    %609 = vmatpush1.bf16.msra.mxu0 %v585
    %610 = vmatprep.subr.bf16.mxu0 0
    %611 = vmatpush1.bf16.msra.mxu0 0
    %612 = vmatprep.subr.bf16.mxu0 0
    %613 = vmatpush1.bf16.msra.mxu0 0
    %614 = vmatprep.subr.bf16.mxu0 0
    %615 = vmatpush1.bf16.msra.mxu0 0
    %616 = vmatprep.subr.bf16.mxu0 0
    %617 = vmatpush1.bf16.msra.mxu0 0
    %618 = vmatprep.subr.bf16.mxu0 0
    %619 = vmatpush1.bf16.msra.mxu0 0
    %620 = vmatprep.subr.bf16.mxu0 0
    %621 = vmatpush1.bf16.msra.mxu0 0
    %622 = vmatprep.subr.bf16.mxu0 0
    %623 = vmatpush1.bf16.msra.mxu0 0
    %624 = vmatprep.subr.bf16.mxu0 0
    %625 = vmatpush1.bf16.msra.mxu0 0
    %626 = vmatprep.mubr.bf16.mxu0 0
    %627 = vmatmul.mubr.bf16.gmra.mrb[0].mxu0 %v529
    %v628 = vpop.f32.mrb[0].mxu0
    %v629 = vadd.f32 0.0, %v628
    %v630 = vpop.f32.mrb[0].mxu0
    %v631 = vpop.f32.mrb[0].mxu0
    %v632 = vadd.f32 0.0, %v631
    %v633 = vpop.f32.mrb[0].mxu0
    %634 = vdwg.mxu0
    %v635 = vadd.f32 %v362, %v629
    %v636 = vadd.f32 %v365, %v632
    %v637 = vld [vmem:[%s6] sm:$0x1]
    %v639 = vlaneseq
    %v640 = vshrl.u32 %v639, 7
    %v641 = vsub.s32 0, %v640
    %v642 = vrot.slane %v637, %v641
    %v644 = vadd.f32 %v635, %v642
    %v645 = vadd.f32 %v636, %v642
    %v646 = vtanh.pop %v644
    %v647 = vtanh.pop %v645
    %v648 = vsub.f32 %v646, %v98
    %v649 = vsub.f32 %v647, %v99
    %v650 = vmul.f32 %v515, %v648
    %v651 = vmul.f32 %v516, %v649
    %v652 = vadd.f32 %v98, %v650
    %v653 = vadd.f32 %v99, %v651
    %654 = vst [vmem:[#allocation11] sm:$0xff] %v652
    %655 = vst [vmem:[#allocation11 + $0x8] sm:$0xff] %v653
    // Predicated region
    $region50: #{tpu_custom_call.1} parent=1 // pred_check
      _
    $region51: #{tpu_custom_call.1} parent=1 // pred_check_branch
      %657 = sbr.rel (0) target = $region53
    $region52: #{tpu_custom_call.1} parent=1 // pred_region
      %s659 = ssub.s32 256, 256
      %660 = vsyncadd [#allocation4], %s659
      %s661 = sshll.u32 [#allocation11], 4
      %s662 = int_to_ptr.vmem [resolvable:$true] %s661
      %667 = dma.vmem_to_hbm [thread:$0]  %s662, 256, %s7, [#allocation4], 128, 128, 8
    $region53: #{tpu_custom_call.1} parent=1 // pred_fallthru
      _
    // Predicated region
    $region54: #{tpu_custom_call.1} parent=1 // pred_check
      _
    $region55: #{tpu_custom_call.1} parent=1 // pred_check_branch
      %669 = sbr.rel (0) target = $region57
    $region56: #{tpu_custom_call.1} parent=1 // pred_region
      %670 = dma.done [#allocation4], 256
    $region57: #{tpu_custom_call.1} parent=1 // pred_fallthru
      _
    %671 = vsyncpa [#allocation3], 1
    %672 = vsyncpa [#allocation6], 1
    %673 = vsyncpa [#allocation9], 1
    %674 = vsyncpa [#allocation4], 1

// kernel: tpu_custom_call.1
$region0: #{tpu_custom_call.1}
  #allocation0 [shape = 'u32[]', space=smem, size = 0x4, offset = 0x4, fixed_abs, tag = 'smem constant byte address 0x4 - core index']
  #allocation1 [shape = 'u32[144,128]{1,0:T(1,128)}', space=vmem, size = 0x12000, scoped, tag = 'internal scratch']
  %s0 = inlined_call_operand.hbm [shape: bf16[16,128], index: 0, kind: input, shape index: {}]
  %s1 = inlined_call_operand.hbm [shape: f32[16,128], index: 1, kind: input, shape index: {}]
  %s2 = inlined_call_operand.hbm [shape: bf16[128,384], index: 2, kind: input, shape index: {}]
  %s3 = inlined_call_operand.vmem [shape: f32[1,384], index: 3, kind: input, shape index: {}]
  %s4 = inlined_call_operand.hbm [shape: bf16[128,256], index: 4, kind: input, shape index: {}]
  %s5 = inlined_call_operand.hbm [shape: bf16[128,128], index: 5, kind: input, shape index: {}]
  %s6 = inlined_call_operand.vmem [shape: f32[1,128], index: 6, kind: input, shape index: {}]
  %s7 = inlined_call_operand.hbm [shape: f32[16,128], index: 7, kind: output, shape index: {}]
  %s8 = sld [smem:[#allocation0]]
  $region58: #{tpu_custom_call.1} parent=0
    _
  %s10 = ssub.s32 1, %s8
  %s11 = scalar_select 0, %s10, %s8
  $region1: #{tpu_custom_call.1} parent=0
    #allocation2 [shape = 'u8[4096]{0}', space=vmem, size = 0x1000, scoped, tag = 'input window, operand 0, single buffered']
    #allocation3 [shape = 's32[1]{0}', space=sflag, size = 0x4, scoped, tag = 'scoped memory for tpu_custom_call.1']
    #allocation4 [shape = 's32[1]{0}', space=sflag, size = 0x4, scoped, tag = 'scoped memory for tpu_custom_call.1']
    #allocation5 [shape = 'u8[8192]{0}', space=vmem, size = 0x2000, scoped, tag = 'input window, operand 1, single buffered']
    #allocation6 [shape = 's32[1]{0}', space=sflag, size = 0x4, scoped, tag = 'scoped memory for tpu_custom_call.1']
    #allocation7 [shape = 'u8[98304]{0}', space=vmem, size = 0x18000, scoped, tag = 'input window, operand 2, single buffered']
    #allocation8 [shape = 'u8[65536]{0}', space=vmem, size = 0x10000, scoped, tag = 'input window, operand 4, single buffered']
    #allocation9 [shape = 's32[1]{0}', space=sflag, size = 0x4, scoped, tag = 'scoped memory for tpu_custom_call.1']
    #allocation10 [shape = 'u8[32768]{0}', space=vmem, size = 0x8000, scoped, tag = 'input window, operand 5, single buffered']
    #allocation11 [shape = 'u8[8192]{0}', space=vmem, size = 0x2000, scoped, tag = 'output window, operand 0, single buffered']
    %12 = vsyncpa [#allocation3], 0
    %13 = vsyncpa [#allocation6], 0
    %14 = vsyncpa [#allocation9], 0
    %15 = vsyncpa [#allocation4], 0
    // Predicated region
    $region2: #{tpu_custom_call.1} parent=1 // pred_check
      _
    $region3: #{tpu_custom_call.1} parent=1 // pred_check_branch
      %17 = sbr.rel (0) target = $region5
    $region4: #{tpu_custom_call.1} parent=1 // pred_region
      %s19 = ssub.s32 128, 128
      %20 = vsyncadd [#allocation3], %s19
      %s21 = sshll.u32 [#allocation2], 4
      %s22 = int_to_ptr.vmem [resolvable:$true] %s21
      %27 = dma.hbm_to_vmem [thread:$0]  %s0, 128, %s22, [#allocation3], 64, 64, 4
    $region5: #{tpu_custom_call.1} parent=1 // pred_fallthru
      _
    // Predicated region
    $region6: #{tpu_custom_call.1} parent=1 // pred_check
      _
    $region7: #{tpu_custom_call.1} parent=1 // pred_check_branch
      %29 = sbr.rel (0) target = $region9
    $region8: #{tpu_custom_call.1} parent=1 // pred_region
      %s31 = ssub.s32 256, 256
      %32 = vsyncadd [#allocation6], %s31
      %s33 = sshll.u32 [#allocation5], 4
      %s34 = int_to_ptr.vmem [resolvable:$true] %s33
      %39 = dma.hbm_to_vmem [thread:$0]  %s1, 256, %s34, [#allocation6], 128, 128, 8
    $region9: #{tpu_custom_call.1} parent=1 // pred_fallthru
      _
    // Predicated region
    $region10: #{tpu_custom_call.1} parent=1 // pred_check
      _
    $region11: #{tpu_custom_call.1} parent=1 // pred_check_branch
      %41 = sbr.rel (0) target = $region13
    $region12: #{tpu_custom_call.1} parent=1 // pred_region
      %s43 = ssub.s32 3072, 3072
      %44 = vsyncadd [#allocation6], %s43
      %s45 = sshll.u32 [#allocation7], 4
      %s46 = int_to_ptr.vmem [resolvable:$true] %s45
      %51 = dma.hbm_to_vmem [thread:$0]  %s2, 3072, %s46, [#allocation6], 192, 192, 12
    $region13: #{tpu_custom_call.1} parent=1 // pred_fallthru
      _
    // Predicated region
    $region14: #{tpu_custom_call.1} parent=1 // pred_check
      _
    $region15: #{tpu_custom_call.1} parent=1 // pred_check_branch
      %53 = sbr.rel (0) target = $region17
    $region16: #{tpu_custom_call.1} parent=1 // pred_region
      _
    $region17: #{tpu_custom_call.1} parent=1 // pred_fallthru
      _
    // Predicated region
    $region18: #{tpu_custom_call.1} parent=1 // pred_check
      _
    $region19: #{tpu_custom_call.1} parent=1 // pred_check_branch
      %55 = sbr.rel (0) target = $region21
    $region20: #{tpu_custom_call.1} parent=1 // pred_region
      %s57 = ssub.s32 2048, 2048
      %58 = vsyncadd [#allocation9], %s57
      %s59 = sshll.u32 [#allocation8], 4
      %s60 = int_to_ptr.vmem [resolvable:$true] %s59
      %65 = dma.hbm_to_vmem [thread:$0]  %s4, 2048, %s60, [#allocation9], 128, 128, 8
    $region21: #{tpu_custom_call.1} parent=1 // pred_fallthru
      _
    // Predicated region
    $region22: #{tpu_custom_call.1} parent=1 // pred_check
      _
    $region23: #{tpu_custom_call.1} parent=1 // pred_check_branch
      %67 = sbr.rel (0) target = $region25
    $region24: #{tpu_custom_call.1} parent=1 // pred_region
      %s69 = ssub.s32 1024, 1024
      %70 = vsyncadd [#allocation9], %s69
      %s71 = sshll.u32 [#allocation10], 4
      %s72 = int_to_ptr.vmem [resolvable:$true] %s71
      %77 = dma.hbm_to_vmem [thread:$0]  %s5, 1024, %s72, [#allocation9], 64, 64, 4
    $region25: #{tpu_custom_call.1} parent=1 // pred_fallthru
      _
    // Predicated region
    $region26: #{tpu_custom_call.1} parent=1 // pred_check
      _
    $region27: #{tpu_custom_call.1} parent=1 // pred_check_branch
      %79 = sbr.rel (0) target = $region29
    $region28: #{tpu_custom_call.1} parent=1 // pred_region
      _
    $region29: #{tpu_custom_call.1} parent=1 // pred_fallthru
      _
    // Predicated region
    $region30: #{tpu_custom_call.1} parent=1 // pred_check
      _
    $region31: #{tpu_custom_call.1} parent=1 // pred_check_branch
      %81 = sbr.rel (0) target = $region33
    $region32: #{tpu_custom_call.1} parent=1 // pred_region
      %82 = dma.done [#allocation3], 128
    $region33: #{tpu_custom_call.1} parent=1 // pred_fallthru
      _
    // Predicated region
    $region34: #{tpu_custom_call.1} parent=1 // pred_check
      _
    $region35: #{tpu_custom_call.1} parent=1 // pred_check_branch
      %84 = sbr.rel (0) target = $region37
    $region36: #{tpu_custom_call.1} parent=1 // pred_region
      %85 = dma.done [#allocation6], 256
    $region37: #{tpu_custom_call.1} parent=1 // pred_fallthru
      _
    // Predicated region
    $region38: #{tpu_custom_call.1} parent=1 // pred_check
      _
    $region39: #{tpu_custom_call.1} parent=1 // pred_check_branch
      %87 = sbr.rel (0) target = $region41
    $region40: #{tpu_custom_call.1} parent=1 // pred_region
      %88 = dma.done [#allocation6], 3072
    $region41: #{tpu_custom_call.1} parent=1 // pred_fallthru
      _
    // Predicated region
    $region42: #{tpu_custom_call.1} parent=1 // pred_check
      _
    $region43: #{tpu_custom_call.1} parent=1 // pred_check_branch
      %90 = sbr.rel (0) target = $region45
    $region44: #{tpu_custom_call.1} parent=1 // pred_region
      %91 = dma.done [#allocation9], 2048
    $region45: #{tpu_custom_call.1} parent=1 // pred_fallthru
      _
    // Predicated region
    $region46: #{tpu_custom_call.1} parent=1 // pred_check
      _
    $region47: #{tpu_custom_call.1} parent=1 // pred_check_branch
      %93 = sbr.rel (0) target = $region49
    $region48: #{tpu_custom_call.1} parent=1 // pred_region
      %94 = dma.done [#allocation9], 1024
    $region49: #{tpu_custom_call.1} parent=1 // pred_fallthru
      _
    %v96 = vld [vmem:[#allocation2] sm:$0xf]
    %v97 = vld [vmem:[#allocation2 + $0x4] sm:$0xf]
    %v98 = vld [vmem:[#allocation5] sm:$0xff]
    %v99 = vld [vmem:[#allocation5 + $0x8] sm:$0xff]
    %v100 = vpack.c.bf16 %v99, %v98
    %v101 = vld [vmem:[#allocation7] sm:$0xff]
    %v102 = vld [vmem:[#allocation7 + $0x8] sm:$0xf]
    %v103 = vld [vmem:[#allocation7 + $0xc] sm:$0xff]
    %v104 = vld [vmem:[#allocation7 + $0x14] sm:$0xf]
    %v105 = vld [vmem:[#allocation7 + $0x18] sm:$0xff]
    %v106 = vld [vmem:[#allocation7 + $0x20] sm:$0xf]
    %v107 = vld [vmem:[#allocation7 + $0x24] sm:$0xff]
    %v108 = vld [vmem:[#allocation7 + $0x2c] sm:$0xf]
    %v109 = vld [vmem:[#allocation7 + $0x30] sm:$0xff]
    %v110 = vld [vmem:[#allocation7 + $0x38] sm:$0xf]
    %v111 = vld [vmem:[#allocation7 + $0x3c] sm:$0xff]
    %v112 = vld [vmem:[#allocation7 + $0x44] sm:$0xf]
    %v113 = vld [vmem:[#allocation7 + $0x48] sm:$0xff]
    %v114 = vld [vmem:[#allocation7 + $0x50] sm:$0xf]
    %v115 = vld [vmem:[#allocation7 + $0x54] sm:$0xff]
    %v116 = vld [vmem:[#allocation7 + $0x5c] sm:$0xf]
    %v117 = vld [vmem:[#allocation7 + $0x60] sm:$0xff]
    %v118 = vld [vmem:[#allocation7 + $0x68] sm:$0xf]
    %v119 = vld [vmem:[#allocation7 + $0x6c] sm:$0xff]
    %v120 = vld [vmem:[#allocation7 + $0x74] sm:$0xf]
    %v121 = vld [vmem:[#allocation7 + $0x78] sm:$0xff]
    %v122 = vld [vmem:[#allocation7 + $0x80] sm:$0xf]
    %v123 = vld [vmem:[#allocation7 + $0x84] sm:$0xff]
    %v124 = vld [vmem:[#allocation7 + $0x8c] sm:$0xf]
    %v125 = vld [vmem:[#allocation7 + $0x90] sm:$0xff]
    %v126 = vld [vmem:[#allocation7 + $0x98] sm:$0xf]
    %v127 = vld [vmem:[#allocation7 + $0x9c] sm:$0xff]
    %v128 = vld [vmem:[#allocation7 + $0xa4] sm:$0xf]
    %v129 = vld [vmem:[#allocation7 + $0xa8] sm:$0xff]
    %v130 = vld [vmem:[#allocation7 + $0xb0] sm:$0xf]
    %v131 = vld [vmem:[#allocation7 + $0xb4] sm:$0xff]
    %v132 = vld [vmem:[#allocation7 + $0xbc] sm:$0xf]
    %v133 = vld [vmem:[%s3] sm:$0x7]
    %v135 = vlaneseq
    %v136 = vshrl.u32 %v135, 7
    %v137 = vsub.s32 0, %v136
    %v138 = vrot.slane %v133, %v137
    %v139 = vlaneseq
    %v140 = vshrl.u32 %v139, 7
    %v141 = vsub.s32 1, %v140
    %v142 = vrot.slane %v133, %v141
    %v143 = vlaneseq
    %v144 = vshrl.u32 %v143, 7
    %v145 = vsub.s32 2, %v144
    %v146 = vrot.slane %v133, %v145
    %v152 = vunpack.c.l.b16 %v96
    %v153 = vunpack.c.l.b16 %v97
    %v154 = vpack.c.b16 %v153, %v152
    %v188 = vunpack.c.l.b16 %v101
    %v189 = vunpack.c.h.b16 %v101
    %v190 = vunpack.c.l.b16 %v102
    %v191 = vunpack.c.l.b16 %v103
    %v192 = vunpack.c.h.b16 %v103
    %v193 = vunpack.c.l.b16 %v104
    %v194 = vunpack.c.l.b16 %v105
    %v195 = vunpack.c.h.b16 %v105
    %v196 = vunpack.c.l.b16 %v106
    %v197 = vunpack.c.l.b16 %v107
    %v198 = vunpack.c.h.b16 %v107
    %v199 = vunpack.c.l.b16 %v108
    %v200 = vunpack.c.l.b16 %v109
    %v201 = vunpack.c.h.b16 %v109
    %v202 = vunpack.c.l.b16 %v110
    %v203 = vunpack.c.l.b16 %v111
    %v204 = vunpack.c.h.b16 %v111
    %v205 = vunpack.c.l.b16 %v112
    %v206 = vunpack.c.l.b16 %v113
    %v207 = vunpack.c.h.b16 %v113
    %v208 = vunpack.c.l.b16 %v114
    %v209 = vunpack.c.l.b16 %v115
    %v210 = vunpack.c.h.b16 %v115
    %v211 = vunpack.c.l.b16 %v116
    %v212 = vunpack.c.l.b16 %v117
    %v213 = vunpack.c.h.b16 %v117
    %v214 = vunpack.c.l.b16 %v118
    %v215 = vunpack.c.l.b16 %v119
    %v216 = vunpack.c.h.b16 %v119
    %v217 = vunpack.c.l.b16 %v120
    %v218 = vunpack.c.l.b16 %v121
    %v219 = vunpack.c.h.b16 %v121
    %v220 = vunpack.c.l.b16 %v122
    %v221 = vunpack.c.l.b16 %v123
    %v222 = vunpack.c.h.b16 %v123
    %v223 = vunpack.c.l.b16 %v124
    %v224 = vunpack.c.l.b16 %v125
    %v225 = vunpack.c.h.b16 %v125
    %v226 = vunpack.c.l.b16 %v126
    %v227 = vunpack.c.l.b16 %v127
    %v228 = vunpack.c.h.b16 %v127
    %v229 = vunpack.c.l.b16 %v128
    %v230 = vunpack.c.l.b16 %v129
    %v231 = vunpack.c.h.b16 %v129
    %v232 = vunpack.c.l.b16 %v130
    %v233 = vunpack.c.l.b16 %v131
    %v234 = vunpack.c.h.b16 %v131
    %v235 = vunpack.c.l.b16 %v132
    %v236 = vpack.c.b16 %v191, %v188
    %v237 = vpack.c.b16 %v192, %v189
    %v238 = vpack.c.b16 %v193, %v190
    %v239 = vpack.c.b16 %v197, %v194
    %v240 = vpack.c.b16 %v198, %v195
    %v241 = vpack.c.b16 %v199, %v196
    %v242 = vpack.c.b16 %v203, %v200
    %v243 = vpack.c.b16 %v204, %v201
    %v244 = vpack.c.b16 %v205, %v202
    %v245 = vpack.c.b16 %v209, %v206
    %v246 = vpack.c.b16 %v210, %v207
    %v247 = vpack.c.b16 %v211, %v208
    %v248 = vpack.c.b16 %v215, %v212
    %v249 = vpack.c.b16 %v216, %v213
    %v250 = vpack.c.b16 %v217, %v214
    %v251 = vpack.c.b16 %v221, %v218
    %v252 = vpack.c.b16 %v222, %v219
    %v253 = vpack.c.b16 %v223, %v220
    %v254 = vpack.c.b16 %v227, %v224
    %v255 = vpack.c.b16 %v228, %v225
    %v256 = vpack.c.b16 %v229, %v226
    %v257 = vpack.c.b16 %v233, %v230
    %v258 = vpack.c.b16 %v234, %v231
    %v259 = vpack.c.b16 %v235, %v232
    %284 = vmatprep.subr.bf16.mxu0 %v237
    %285 = vmatpush1.bf16.msra.mxu0 %v236
    %286 = vmatprep.subr.bf16.mxu0 %v240
    %287 = vmatpush1.bf16.msra.mxu0 %v239
    %288 = vmatprep.subr.bf16.mxu0 %v243
    %289 = vmatpush1.bf16.msra.mxu0 %v242
    %290 = vmatprep.subr.bf16.mxu0 %v246
    %291 = vmatpush1.bf16.msra.mxu0 %v245
    %292 = vmatprep.subr.bf16.mxu0 %v249
    %293 = vmatpush1.bf16.msra.mxu0 %v248
    %294 = vmatprep.subr.bf16.mxu0 %v252
    %295 = vmatpush1.bf16.msra.mxu0 %v251
    %296 = vmatprep.subr.bf16.mxu0 %v255
    %297 = vmatpush1.bf16.msra.mxu0 %v254
    %298 = vmatprep.subr.bf16.mxu0 %v258
    %299 = vmatpush1.bf16.msra.mxu0 %v257
    %300 = vmatprep.subr.bf16.mxu0 0
    %301 = vmatpush1.bf16.msra.mxu0 0
    %302 = vmatprep.subr.bf16.mxu0 0
    %303 = vmatpush1.bf16.msra.mxu0 0
    %304 = vmatprep.subr.bf16.mxu0 0
    %305 = vmatpush1.bf16.msra.mxu0 0
    %306 = vmatprep.subr.bf16.mxu0 0
    %307 = vmatpush1.bf16.msra.mxu0 0
    %308 = vmatprep.subr.bf16.mxu0 0
    %309 = vmatpush1.bf16.msra.mxu0 0
    %310 = vmatprep.subr.bf16.mxu0 0
    %311 = vmatpush1.bf16.msra.mxu0 0
    %312 = vmatprep.subr.bf16.mxu0 0
    %313 = vmatpush1.bf16.msra.mxu0 0
    %314 = vmatprep.subr.bf16.mxu0 0
    %315 = vmatpush1.bf16.msra.mxu0 0
    %316 = vmatprep.mubr.bf16.mxu0 0
    %317 = vmatmul.mubr.bf16.gmra.mrb[0].mxu0 %v154
    %v318 = vpop.f32.mrb[0].mxu0
    %v319 = vadd.f32 %v138, %v318
    %v320 = vpop.f32.mrb[0].mxu0
    %v321 = vadd.f32 %v142, %v320
    %v322 = vpop.f32.mrb[0].mxu0
    %v323 = vadd.f32 %v138, %v322
    %v324 = vpop.f32.mrb[0].mxu0
    %v325 = vadd.f32 %v142, %v324
    %326 = vdwg.mxu0
    %327 = vmatprep.subr.bf16.mxu0 0
    %328 = vmatpush1.bf16.msra.mxu0 %v238
    %329 = vmatprep.subr.bf16.mxu0 0
    %330 = vmatpush1.bf16.msra.mxu0 %v241
    %331 = vmatprep.subr.bf16.mxu0 0
    %332 = vmatpush1.bf16.msra.mxu0 %v244
    %333 = vmatprep.subr.bf16.mxu0 0
    %334 = vmatpush1.bf16.msra.mxu0 %v247
    %335 = vmatprep.subr.bf16.mxu0 0
    %336 = vmatpush1.bf16.msra.mxu0 %v250
    %337 = vmatprep.subr.bf16.mxu0 0
    %338 = vmatpush1.bf16.msra.mxu0 %v253
    %339 = vmatprep.subr.bf16.mxu0 0
    %340 = vmatpush1.bf16.msra.mxu0 %v256
    %341 = vmatprep.subr.bf16.mxu0 0
    %342 = vmatpush1.bf16.msra.mxu0 %v259
    %343 = vmatprep.subr.bf16.mxu0 0
    %344 = vmatpush1.bf16.msra.mxu0 0
    %345 = vmatprep.subr.bf16.mxu0 0
    %346 = vmatpush1.bf16.msra.mxu0 0
    %347 = vmatprep.subr.bf16.mxu0 0
    %348 = vmatpush1.bf16.msra.mxu0 0
    %349 = vmatprep.subr.bf16.mxu0 0
    %350 = vmatpush1.bf16.msra.mxu0 0
    %351 = vmatprep.subr.bf16.mxu0 0
    %352 = vmatpush1.bf16.msra.mxu0 0
    %353 = vmatprep.subr.bf16.mxu0 0
    %354 = vmatpush1.bf16.msra.mxu0 0
    %355 = vmatprep.subr.bf16.mxu0 0
    %356 = vmatpush1.bf16.msra.mxu0 0
    %357 = vmatprep.subr.bf16.mxu0 0
    %358 = vmatpush1.bf16.msra.mxu0 0
    %359 = vmatprep.mubr.bf16.mxu0 0
    %360 = vmatmul.mubr.bf16.gmra.mrb[0].mxu0 %v154
    %v361 = vpop.f32.mrb[0].mxu0
    %v362 = vadd.f32 %v146, %v361
    %v363 = vpop.f32.mrb[0].mxu0
    %v364 = vpop.f32.mrb[0].mxu0
    %v365 = vadd.f32 %v146, %v364
    %v366 = vpop.f32.mrb[0].mxu0
    %367 = vdwg.mxu0
    %v368 = vld [vmem:[#allocation8] sm:$0xff]
    %v369 = vld [vmem:[#allocation8 + $0x8] sm:$0xff]
    %v370 = vld [vmem:[#allocation8 + $0x10] sm:$0xff]
    %v371 = vld [vmem:[#allocation8 + $0x18] sm:$0xff]
    %v372 = vld [vmem:[#allocation8 + $0x20] sm:$0xff]
    %v373 = vld [vmem:[#allocation8 + $0x28] sm:$0xff]
    %v374 = vld [vmem:[#allocation8 + $0x30] sm:$0xff]
    %v375 = vld [vmem:[#allocation8 + $0x38] sm:$0xff]
    %v376 = vld [vmem:[#allocation8 + $0x40] sm:$0xff]
    %v377 = vld [vmem:[#allocation8 + $0x48] sm:$0xff]
    %v378 = vld [vmem:[#allocation8 + $0x50] sm:$0xff]
    %v379 = vld [vmem:[#allocation8 + $0x58] sm:$0xff]
    %v380 = vld [vmem:[#allocation8 + $0x60] sm:$0xff]
    %v381 = vld [vmem:[#allocation8 + $0x68] sm:$0xff]
    %v382 = vld [vmem:[#allocation8 + $0x70] sm:$0xff]
    %v383 = vld [vmem:[#allocation8 + $0x78] sm:$0xff]
    %v400 = vunpack.c.l.b16 %v368
    %v401 = vunpack.c.h.b16 %v368
    %v402 = vunpack.c.l.b16 %v369
    %v403 = vunpack.c.h.b16 %v369
    %v404 = vunpack.c.l.b16 %v370
    %v405 = vunpack.c.h.b16 %v370
    %v406 = vunpack.c.l.b16 %v371
    %v407 = vunpack.c.h.b16 %v371
    %v408 = vunpack.c.l.b16 %v372
    %v409 = vunpack.c.h.b16 %v372
    %v410 = vunpack.c.l.b16 %v373
    %v411 = vunpack.c.h.b16 %v373
    %v412 = vunpack.c.l.b16 %v374
    %v413 = vunpack.c.h.b16 %v374
    %v414 = vunpack.c.l.b16 %v375
    %v415 = vunpack.c.h.b16 %v375
    %v416 = vunpack.c.l.b16 %v376
    %v417 = vunpack.c.h.b16 %v376
    %v418 = vunpack.c.l.b16 %v377
    %v419 = vunpack.c.h.b16 %v377
    %v420 = vunpack.c.l.b16 %v378
    %v421 = vunpack.c.h.b16 %v378
    %v422 = vunpack.c.l.b16 %v379
    %v423 = vunpack.c.h.b16 %v379
    %v424 = vunpack.c.l.b16 %v380
    %v425 = vunpack.c.h.b16 %v380
    %v426 = vunpack.c.l.b16 %v381
    %v427 = vunpack.c.h.b16 %v381
    %v428 = vunpack.c.l.b16 %v382
    %v429 = vunpack.c.h.b16 %v382
    %v430 = vunpack.c.l.b16 %v383
    %v431 = vunpack.c.h.b16 %v383
    %v432 = vpack.c.b16 %v402, %v400
    %v433 = vpack.c.b16 %v403, %v401
    %v434 = vpack.c.b16 %v406, %v404
    %v435 = vpack.c.b16 %v407, %v405
    %v436 = vpack.c.b16 %v410, %v408
    %v437 = vpack.c.b16 %v411, %v409
    %v438 = vpack.c.b16 %v414, %v412
    %v439 = vpack.c.b16 %v415, %v413
    %v440 = vpack.c.b16 %v418, %v416
    %v441 = vpack.c.b16 %v419, %v417
    %v442 = vpack.c.b16 %v422, %v420
    %v443 = vpack.c.b16 %v423, %v421
    %v444 = vpack.c.b16 %v426, %v424
    %v445 = vpack.c.b16 %v427, %v425
    %v446 = vpack.c.b16 %v430, %v428
    %v447 = vpack.c.b16 %v431, %v429
    %464 = vmatprep.subr.bf16.mxu0 %v433
    %465 = vmatpush1.bf16.msra.mxu0 %v432
    %466 = vmatprep.subr.bf16.mxu0 %v435
    %467 = vmatpush1.bf16.msra.mxu0 %v434
    %468 = vmatprep.subr.bf16.mxu0 %v437
    %469 = vmatpush1.bf16.msra.mxu0 %v436
    %470 = vmatprep.subr.bf16.mxu0 %v439
    %471 = vmatpush1.bf16.msra.mxu0 %v438
    %472 = vmatprep.subr.bf16.mxu0 %v441
    %473 = vmatpush1.bf16.msra.mxu0 %v440
    %474 = vmatprep.subr.bf16.mxu0 %v443
    %475 = vmatpush1.bf16.msra.mxu0 %v442
    %476 = vmatprep.subr.bf16.mxu0 %v445
    %477 = vmatpush1.bf16.msra.mxu0 %v444
    %478 = vmatprep.subr.bf16.mxu0 %v447
    %479 = vmatpush1.bf16.msra.mxu0 %v446
    %480 = vmatprep.subr.bf16.mxu0 0
    %481 = vmatpush1.bf16.msra.mxu0 0
    %482 = vmatprep.subr.bf16.mxu0 0
    %483 = vmatpush1.bf16.msra.mxu0 0
    %484 = vmatprep.subr.bf16.mxu0 0
    %485 = vmatpush1.bf16.msra.mxu0 0
    %486 = vmatprep.subr.bf16.mxu0 0
    %487 = vmatpush1.bf16.msra.mxu0 0
    %488 = vmatprep.subr.bf16.mxu0 0
    %489 = vmatpush1.bf16.msra.mxu0 0
    %490 = vmatprep.subr.bf16.mxu0 0
    %491 = vmatpush1.bf16.msra.mxu0 0
    %492 = vmatprep.subr.bf16.mxu0 0
    %493 = vmatpush1.bf16.msra.mxu0 0
    %494 = vmatprep.subr.bf16.mxu0 0
    %495 = vmatpush1.bf16.msra.mxu0 0
    %496 = vmatprep.mubr.bf16.mxu0 0
    %497 = vmatmul.mubr.bf16.gmra.mrb[0].mxu0 %v100
    %v498 = vpop.f32.mrb[0].mxu0
    %v499 = vadd.f32 0.0, %v498
    %v500 = vpop.f32.mrb[0].mxu0
    %v501 = vadd.f32 0.0, %v500
    %v502 = vpop.f32.mrb[0].mxu0
    %v503 = vadd.f32 0.0, %v502
    %v504 = vpop.f32.mrb[0].mxu0
    %v505 = vadd.f32 0.0, %v504
    %506 = vdwg.mxu0
    %v507 = vadd.f32 %v319, %v499
    %v508 = vadd.f32 %v323, %v503
    %v509 = vmul.f32 %v507, 0.5
    %v510 = vmul.f32 %v508, 0.5
    %v511 = vtanh.pop %v509
    %v512 = vtanh.pop %v510
    %v513 = vadd.f32 %v511, 1.0
    %v514 = vadd.f32 %v512, 1.0
    %v515 = vmul.f32 %v513, 0.5
    %v516 = vmul.f32 %v514, 0.5
    %v517 = vadd.f32 %v321, %v501
    %v518 = vadd.f32 %v325, %v505
    %v519 = vmul.f32 %v517, 0.5
    %v520 = vmul.f32 %v518, 0.5
    %v521 = vtanh.pop %v519
    %v522 = vtanh.pop %v520
    %v523 = vadd.f32 %v521, 1.0
    %v524 = vadd.f32 %v522, 1.0
    %v525 = vmul.f32 %v523, 0.5
    %v526 = vmul.f32 %v524, 0.5
    %v527 = vmul.f32 %v525, %v98
    %v528 = vmul.f32 %v526, %v99
    %v529 = vpack.c.bf16 %v528, %v527
    %v530 = vld [vmem:[#allocation10] sm:$0xf]
    %v531 = vld [vmem:[#allocation10 + $0x4] sm:$0xf]
    %v532 = vld [vmem:[#allocation10 + $0x8] sm:$0xf]
    %v533 = vld [vmem:[#allocation10 + $0xc] sm:$0xf]
    %v534 = vld [vmem:[#allocation10 + $0x10] sm:$0xf]
    %v535 = vld [vmem:[#allocation10 + $0x14] sm:$0xf]
    %v536 = vld [vmem:[#allocation10 + $0x18] sm:$0xf]
    %v537 = vld [vmem:[#allocation10 + $0x1c] sm:$0xf]
    %v538 = vld [vmem:[#allocation10 + $0x20] sm:$0xf]
    %v539 = vld [vmem:[#allocation10 + $0x24] sm:$0xf]
    %v540 = vld [vmem:[#allocation10 + $0x28] sm:$0xf]
    %v541 = vld [vmem:[#allocation10 + $0x2c] sm:$0xf]
    %v542 = vld [vmem:[#allocation10 + $0x30] sm:$0xf]
    %v543 = vld [vmem:[#allocation10 + $0x34] sm:$0xf]
    %v544 = vld [vmem:[#allocation10 + $0x38] sm:$0xf]
    %v545 = vld [vmem:[#allocation10 + $0x3c] sm:$0xf]
    %v562 = vunpack.c.l.b16 %v530
    %v563 = vunpack.c.l.b16 %v531
    %v564 = vunpack.c.l.b16 %v532
    %v565 = vunpack.c.l.b16 %v533
    %v566 = vunpack.c.l.b16 %v534
    %v567 = vunpack.c.l.b16 %v535
    %v568 = vunpack.c.l.b16 %v536
    %v569 = vunpack.c.l.b16 %v537
    %v570 = vunpack.c.l.b16 %v538
    %v571 = vunpack.c.l.b16 %v539
    %v572 = vunpack.c.l.b16 %v540
    %v573 = vunpack.c.l.b16 %v541
    %v574 = vunpack.c.l.b16 %v542
    %v575 = vunpack.c.l.b16 %v543
    %v576 = vunpack.c.l.b16 %v544
    %v577 = vunpack.c.l.b16 %v545
    %v578 = vpack.c.b16 %v563, %v562
    %v579 = vpack.c.b16 %v565, %v564
    %v580 = vpack.c.b16 %v567, %v566
    %v581 = vpack.c.b16 %v569, %v568
    %v582 = vpack.c.b16 %v571, %v570
    %v583 = vpack.c.b16 %v573, %v572
    %v584 = vpack.c.b16 %v575, %v574
    %v585 = vpack.c.b16 %v577, %v576
    %594 = vmatprep.subr.bf16.mxu0 0
    %595 = vmatpush1.bf16.msra.mxu0 %v578
    %596 = vmatprep.subr.bf16.mxu0 0
    %597 = vmatpush1.bf16.msra.mxu0 %v579
    %598 = vmatprep.subr.bf16.mxu0 0
    %599 = vmatpush1.bf16.msra.mxu0 %v580
    %600 = vmatprep.subr.bf16.mxu0 0
    %601 = vmatpush1.bf16.msra.mxu0 %v581
    %602 = vmatprep.subr.bf16.mxu0 0
    %603 = vmatpush1.bf16.msra.mxu0 %v582
    %604 = vmatprep.subr.bf16.mxu0 0
    %605 = vmatpush1.bf16.msra.mxu0 %v583
    %606 = vmatprep.subr.bf16.mxu0 0
    %607 = vmatpush1.bf16.msra.mxu0 %v584
    %608 = vmatprep.subr.bf16.mxu0 0
    %609 = vmatpush1.bf16.msra.mxu0 %v585
    %610 = vmatprep.subr.bf16.mxu0 0
    %611 = vmatpush1.bf16.msra.mxu0 0
    %612 = vmatprep.subr.bf16.mxu0 0
    %613 = vmatpush1.bf16.msra.mxu0 0
    %614 = vmatprep.subr.bf16.mxu0 0
    %615 = vmatpush1.bf16.msra.mxu0 0
    %616 = vmatprep.subr.bf16.mxu0 0
    %617 = vmatpush1.bf16.msra.mxu0 0
    %618 = vmatprep.subr.bf16.mxu0 0
    %619 = vmatpush1.bf16.msra.mxu0 0
    %620 = vmatprep.subr.bf16.mxu0 0
    %621 = vmatpush1.bf16.msra.mxu0 0
    %622 = vmatprep.subr.bf16.mxu0 0
    %623 = vmatpush1.bf16.msra.mxu0 0
    %624 = vmatprep.subr.bf16.mxu0 0
    %625 = vmatpush1.bf16.msra.mxu0 0
    %626 = vmatprep.mubr.bf16.mxu0 0
    %627 = vmatmul.mubr.bf16.gmra.mrb[0].mxu0 %v529
    %v628 = vpop.f32.mrb[0].mxu0
    %v629 = vadd.f32 0.0, %v628
    %v630 = vpop.f32.mrb[0].mxu0
    %v631 = vpop.f32.mrb[0].mxu0
    %v632 = vadd.f32 0.0, %v631
    %v633 = vpop.f32.mrb[0].mxu0
    %634 = vdwg.mxu0
    %v635 = vadd.f32 %v362, %v629
    %v636 = vadd.f32 %v365, %v632
    %v637 = vld [vmem:[%s6] sm:$0x1]
    %v639 = vlaneseq
    %v640 = vshrl.u32 %v639, 7
    %v641 = vsub.s32 0, %v640
    %v642 = vrot.slane %v637, %v641
    %v644 = vadd.f32 %v635, %v642
    %v645 = vadd.f32 %v636, %v642
    %v646 = vtanh.pop %v644
    %v647 = vtanh.pop %v645
    %v648 = vsub.f32 %v646, %v98
    %v649 = vsub.f32 %v647, %v99
    %v650 = vmul.f32 %v515, %v648
    %v651 = vmul.f32 %v516, %v649
    %v652 = vadd.f32 %v98, %v650
    %v653 = vadd.f32 %v99, %v651
    %654 = vst [vmem:[#allocation11] sm:$0xff] %v652
    %655 = vst [vmem:[#allocation11 + $0x8] sm:$0xff] %v653
    // Predicated region
    $region50: #{tpu_custom_call.1} parent=1 // pred_check
      _
    $region51: #{tpu_custom_call.1} parent=1 // pred_check_branch
      %657 = sbr.rel (0) target = $region53
    $region52: #{tpu_custom_call.1} parent=1 // pred_region
      %s659 = ssub.s32 256, 256
      %660 = vsyncadd [#allocation4], %s659
      %s661 = sshll.u32 [#allocation11], 4
      %s662 = int_to_ptr.vmem [resolvable:$true] %s661
      %667 = dma.vmem_to_hbm [thread:$0]  %s662, 256, %s7, [#allocation4], 128, 128, 8
    $region53: #{tpu_custom_call.1} parent=1 // pred_fallthru
      _
    // Predicated region
    $region54: #{tpu_custom_call.1} parent=1 // pred_check
      _
    $region55: #{tpu_custom_call.1} parent=1 // pred_check_branch
      %669 = sbr.rel (0) target = $region57
    $region56: #{tpu_custom_call.1} parent=1 // pred_region
      %670 = dma.done [#allocation4], 256
    $region57: #{tpu_custom_call.1} parent=1 // pred_fallthru
      _
    %671 = vsyncpa [#allocation3], 1
    %672 = vsyncpa [#allocation6], 1
    %673 = vsyncpa [#allocation9], 1
    %674 = vsyncpa [#allocation4], 1

</llo_original>
